<compile_context>
chip_gen: v7x
topology: tpu7x:2x2x1
jax: 0.10.0
libtpu: 0.0.40
codegen_flags: <defaults>
</compile_context>

<pallas_src>
import functools
import math

import jax
import jax.numpy as jnp
from jax.experimental import pallas as pl
from jax.experimental.pallas import tpu as pltpu


# ----------------------------------------------------------------------------
# Haar analysis matrices (equivalent to DWT_1D / IDWT_1D('haar'))
# ----------------------------------------------------------------------------
def _haar_matrices(d, dtype=jnp.float32):
    """Wl[i,2i]=Wl[i,2i+1]=1/sqrt(2); Wh[i,2i]=1/sqrt(2), Wh[i,2i+1]=-1/sqrt(2).

    DWT:  L = x @ Wl.T,  H = x @ Wh.T   (along the feature dim)
    IDWT: x = L @ Wl + H @ Wh
    """
    half = d // 2
    c = 1.0 / math.sqrt(2.0)
    rows = jnp.arange(half)
    wl = jnp.zeros((half, d), dtype)
    wl = wl.at[rows, 2 * rows].set(c).at[rows, 2 * rows + 1].set(c)
    wh = jnp.zeros((half, d), dtype)
    wh = wh.at[rows, 2 * rows].set(c).at[rows, 2 * rows + 1].set(-c)
    return wl, wh


def _softmax_lastdim(x):
    """Softmax along last dim; normalisation via EUP reciprocal + 1 Newton step."""
    m = jnp.max(x, axis=-1, keepdims=True)
    e = jnp.exp(x - m)
    s = jnp.sum(e, axis=-1, keepdims=True)
    r = pl.reciprocal(s, approx=True)      # EUP slot (otherwise idle after exp)
    r = r * (2.0 - s * r)                  # one Newton step -> ~f32-exact
    return e * r


# ----------------------------------------------------------------------------
# Kernel
# ----------------------------------------------------------------------------
def wavelet_attn_kernel(q_ref, k_ref, v_ref, wq_ref, wkv_ref, wcomb_ref, bo_ref,
                        out_ref, *, seq_len, feat_dim, half, mxu_dtype):
    f32 = jnp.float32
    S, D = seq_len, feat_dim
    Bt = q_ref.shape[0]
    R = Bt * S
    cdt = f32 if mxu_dtype is None else mxu_dtype

    # ---- DWT: three separate (R, D) @ (D, D) dots; analysis weights stay
    # resident MXU-side (no in-kernel qkv concatenation / band slicing temps).
    # 1/sqrt(head_dim) is pre-folded into wq at trace time.
    q_b = jnp.dot(q_ref[...].reshape(R, D), wq_ref[...],
                  preferred_element_type=f32).reshape(Bt, S, D)
    k_b = jnp.dot(k_ref[...].reshape(R, D), wkv_ref[...],
                  preferred_element_type=f32).reshape(Bt, S, D)
    v_b = jnp.dot(v_ref[...].reshape(R, D), wkv_ref[...],
                  preferred_element_type=f32).reshape(Bt, S, D)

    def band_attention(qb, kb, vb):
        s = jnp.einsum('bqd,bkd->bqk', qb.astype(cdt), kb.astype(cdt),
                       preferred_element_type=f32)
        p = _softmax_lastdim(s)
        # TODO(synk): nn.Dropout(attention_dropout) is identity in eval mode; not applied.
        return jnp.einsum('bqk,bkd->bqd', p.astype(cdt), vb.astype(cdt),
                          preferred_element_type=f32)

    wcomb = wcomb_ref[...]
    if half % 128 == 0:
        # True half-width contractions (tile-aligned lane slices): half the
        # QK^T / PV MXU FLOPs of the masked full-D variant.
        o_L = band_attention(q_b[..., :half], k_b[..., :half], v_b[..., :half])
        o_H = band_attention(q_b[..., half:], k_b[..., half:], v_b[..., half:])
        y = (jnp.dot(o_L.reshape(R, half).astype(cdt), wcomb[:half, :],
                     preferred_element_type=f32)
             + jnp.dot(o_H.reshape(R, half).astype(cdt), wcomb[half:, :],
                       preferred_element_type=f32))
    else:
        # D/2 < 128: zero-mask the complementary band lanes (cheap VPU selects).
        # The zeros make the full-width contraction equal the per-band one, and
        # p_L@v_L / p_H@v_H land in disjoint lanes so one add reconstitutes
        # [L_out | H_out] with no concatenation.
        lane = jax.lax.broadcasted_iota(jnp.int32, (1, 1, D), 2)
        low = lane < half
        k_L = jnp.where(low, k_b, 0.0)
        k_H = k_b - k_L
        v_L = jnp.where(low, v_b, 0.0)
        v_H = v_b - v_L
        o = band_attention(q_b, k_L, v_L) + band_attention(q_b, k_H, v_H)
        y = jnp.dot(o.reshape(R, D).astype(cdt), wcomb,
                    preferred_element_type=f32)

    # ---- fused IDWT + output projection bias ---------------------------------
    y = y + bo_ref[...]                       # (R, D) + (1, D)
    out_ref[...] = y.reshape(out_ref.shape).astype(out_ref.dtype)


# ----------------------------------------------------------------------------
# VMEM / tiling heuristics (generation-aware)
# ----------------------------------------------------------------------------
def _vmem_capacity_bytes():
    try:
        return int(pltpu.get_tpu_info().vmem_capacity_bytes)
    except Exception:
        return 64 * 2**20          # conservative default (v7x-sized)


def _num_tensorcores():
    try:
        kind = jax.local_devices()[0].device_kind.lower()
    except Exception:
        return 1
    return 2 if ("v7" in kind or "7x" in kind) else 1


def _block_vmem_bytes(bt, s, d, act_itemsize=4):
    """Per-grid-step VMEM footprint: pipelined I/O, weights, band/score temps."""
    act_blk = bt * s * d
    return (8 * act_blk * act_itemsize        # q,k,v,out blocks, double-buffered
            + 9 * act_blk * 4                 # f32 band / mask / output temporaries
            + 8 * bt * s * s * 4              # f32 score & softmax temporaries (2 bands)
            + 2 * (3 * d * d + d) * 4)        # weight operands incl. buffering headroom


def _pick_batch_tile(b, s, d, act_itemsize, budget_bytes, min_grid=1):
    """Largest divisor of B fitting the VMEM budget and giving >= min_grid steps."""
    for bt in range(b, 0, -1):
        if b % bt:
            continue
        if b // bt < min_grid:
            continue
        if _block_vmem_bytes(bt, s, d, act_itemsize) <= budget_bytes:
            return bt
    # TODO(synk): flash-style q/kv sequence tiling + online softmax when even
    # Bt=1 exceeds the budget (S >~ 1-1.5K on v7x, ~2K on v5e/v6e).
    return 1


def _const_spec(shape, single_buffer):
    """BlockSpec for a loop-invariant operand; single-buffered when supported."""
    index_map = lambda b: (0,) * len(shape)
    if single_buffer:
        try:
            return pl.BlockSpec(shape, index_map, pipeline_mode=pl.Buffered(1))
        except (TypeError, AttributeError, ValueError):
            pass
    return pl.BlockSpec(shape, index_map)


# ----------------------------------------------------------------------------
# Wrapper
# ----------------------------------------------------------------------------
def wavelet_multihead_attention(q, k, v, wl, wh, wo, bo, *, head_dim,
                                batch_tile=None, precision="f32",
                                lane_dense_io=None):
    """q, k, v: (B, S, D). wl/wh: (D//2, D). wo: (D, D). bo: (D,) or (1, D).

    precision: "f32" (default) or "bf16" (casts only at matmul inputs; softmax
    and accumulation stay f32 -- matmul-only cast also suits v5e).
    """
    B, S, D = q.shape
    half = D // 2
    scale = 1.0 / math.sqrt(float(head_dim))
    f32 = jnp.float32
    out_dtype = q.dtype

    use_bf16 = (precision == "bf16")
    w_dt = jnp.bfloat16 if use_bf16 else f32
    mxu_dtype = jnp.bfloat16 if use_bf16 else None

    # Trace-time fused weights (tiny O(D^2) work):
    #   W_dwt  = [Wl.T | Wh.T]                 -> x @ W_dwt = [x_L | x_H]
    #   W_comb = [[Wl @ Wo.T], [Wh @ Wo.T]]    -> [L|H] @ W_comb = IDWT(L,H) @ Wo.T
    w_dwt = jnp.concatenate([wl.T, wh.T], axis=1).astype(f32)
    w_dwt_q = (w_dwt * scale).astype(w_dt)      # fold 1/sqrt(head_dim) into q's DWT
    w_dwt_kv = w_dwt.astype(w_dt)
    w_comb = jnp.concatenate([wl @ wo.T, wh @ wo.T], axis=0).astype(w_dt)
    bo2 = bo.reshape(1, D).astype(f32)

    if use_bf16:
        q = q.astype(jnp.bfloat16)
        k = k.astype(jnp.bfloat16)
        v = v.astype(jnp.bfloat16)

    act_item = jnp.dtype(q.dtype).itemsize
    vmem_cap = _vmem_capacity_bytes()
    n_tc = _num_tensorcores()

    if batch_tile is None:
        Bt = _pick_batch_tile(B, S, D, act_item,
                              budget_bytes=int(0.4 * vmem_cap),
                              min_grid=min(n_tc, B))
    else:
        Bt = batch_tile
    assert B % Bt == 0
    grid = (B // Bt,)

    # Lane-dense I/O when D < 128 but S*D folds into whole 128-lane vregs.
    if lane_dense_io is None:
        lane_dense_io = (D % 128 != 0) and ((S * D) % 128 == 0)

    est = _block_vmem_bytes(Bt, S, D, act_item)
    cp_kwargs = dict(dimension_semantics=("parallel",))
    if est > 12 * 2**20:
        cp_kwargs["vmem_limit_bytes"] = int(min(2 * est, 0.75 * vmem_cap))

    kernel = functools.partial(wavelet_attn_kernel, seq_len=S, feat_dim=D,
                               half=half, mxu_dtype=mxu_dtype)

    def _run(fold_io, single_buffer_weights):
        if fold_io:
            n128 = (S * D) // 128
            qi = q.reshape(B, n128, 128)
            ki = k.reshape(B, n128, 128)
            vi = v.reshape(B, n128, 128)
            act_shape = (Bt, n128, 128)
            out_struct = jax.ShapeDtypeStruct((B, n128, 128), out_dtype)
        else:
            qi, ki, vi = q, k, v
            act_shape = (Bt, S, D)
            out_struct = jax.ShapeDtypeStruct((B, S, D), out_dtype)

        act_spec = pl.BlockSpec(act_shape,
                                lambda b: (b,) + (0,) * (len(act_shape) - 1))
        w_spec = _const_spec((D, D), single_buffer_weights)
        b_spec = _const_spec((1, D), single_buffer_weights)

        out = pl.pallas_call(
            kernel,
            out_shape=out_struct,
            grid=grid,
            in_specs=[act_spec, act_spec, act_spec, w_spec, w_spec, w_spec, b_spec],
            out_specs=act_spec,
            compiler_params=pltpu.CompilerParams(**cp_kwargs),
        )(qi, ki, vi, w_dwt_q, w_dwt_kv, w_comb, bo2)
        return out.reshape(B, S, D) if fold_io else out

    try:
        # Preferred path: lane-dense folded I/O + single-buffered weights.
        return _run(lane_dense_io, True)
    except Exception:
        # Robust fallback: plain (B, S, D) I/O, default (double) weight buffering.
        return _run(False, False)


# ----------------------------------------------------------------------------
# Pure-JAX reference (mirror of the PyTorch forward, eval mode, no mask)
# ----------------------------------------------------------------------------
def _reference(q, k, v, wl, wh, wo, bo, head_dim):
    q_L, q_H = q @ wl.T, q @ wh.T
    k_L, k_H = k @ wl.T, k @ wh.T
    v_L, v_H = v @ wl.T, v @ wh.T
    scale = 1.0 / math.sqrt(float(head_dim))
    attn_L = jax.nn.softmax(jnp.einsum('bqd,bkd->bqk', q_L, k_L) * scale, axis=-1)
    attn_H = jax.nn.softmax(jnp.einsum('bqd,bkd->bqk', q_H, k_H) * scale, axis=-1)
    recon = (attn_L @ v_L) @ wl + (attn_H @ v_H) @ wh
    return recon @ wo.T + bo


if __name__ == "__main__":
    B, S, D, NUM_HEADS = 2, 8, 32, 2
    head_dim = D // (NUM_HEADS * 2)          # = 8, as in the module __init__

    key = jax.random.PRNGKey(0)
    kq, kk, kv, kw, kb = jax.random.split(key, 5)
    q = jax.random.normal(kq, (B, S, D), jnp.float32)
    k = jax.random.normal(kk, (B, S, D), jnp.float32)
    v = jax.random.normal(kv, (B, S, D), jnp.float32)

    # deterministic parameter init
    wl, wh = _haar_matrices(D)                                      # haar DWT/IDWT matrices
    wo = jax.random.normal(kw, (D, D), jnp.float32) / math.sqrt(D)  # W_o.weight
    bo = jax.random.normal(kb, (D,), jnp.float32) * 0.01            # W_o.bias

    out = wavelet_multihead_attention(q, k, v, wl, wh, wo, bo, head_dim=head_dim)
    out = jax.block_until_ready(out)

    ref = _reference(q, k, v, wl, wh, wo, bo, head_dim)
    assert out.shape == (B, S, D)
    # f32 kernel with fused (re-associated) weight matrices and an EUP-based
    # softmax reciprocal: slightly relaxed but tight tolerance.
    err = jnp.max(jnp.abs(out - ref))
    assert jnp.allclose(out, ref, atol=5e-4, rtol=5e-4), f"max abs err {err}"

    print("KERNEL_OK")
</pallas_src>

<mosaic_0001>
module attributes {stable_mosaic.version = 11 : i64} {
  func.func @wavelet_attn_kernel(%arg0: i32, %arg1: memref<2x2x128xf32, #tpu.memory_space<vmem>>, %arg2: memref<2x2x128xf32, #tpu.memory_space<vmem>>, %arg3: memref<2x2x128xf32, #tpu.memory_space<vmem>>, %arg4: memref<32x32xf32, #tpu.memory_space<vmem>>, %arg5: memref<32x32xf32, #tpu.memory_space<vmem>>, %arg6: memref<32x32xf32, #tpu.memory_space<vmem>>, %arg7: memref<1x32xf32, #tpu.memory_space<vmem>>, %arg8: memref<2x2x128xf32, #tpu.memory_space<vmem>>) attributes {dimension_semantics = [#tpu.dimension_semantics<parallel>], iteration_bounds = array<i64: 1>, scalar_prefetch = 0 : i64, scratch_operands = 0 : i64, tpu.core_type = #tpu.core_type<tc>, window_params = [{transform_indices = @transform_0, window_bounds = array<i64: 2, 2, 128>}, {transform_indices = @transform_1, window_bounds = array<i64: 2, 2, 128>}, {transform_indices = @transform_2, window_bounds = array<i64: 2, 2, 128>}, {pipeline_mode = #tpu.pipeline_mode<synchronous>, transform_indices = @transform_3, window_bounds = array<i64: 32, 32>}, {pipeline_mode = #tpu.pipeline_mode<synchronous>, transform_indices = @transform_4, window_bounds = array<i64: 32, 32>}, {pipeline_mode = #tpu.pipeline_mode<synchronous>, transform_indices = @transform_5, window_bounds = array<i64: 32, 32>}, {pipeline_mode = #tpu.pipeline_mode<synchronous>, transform_indices = @transform_6, window_bounds = array<i64: 1, 32>}, {transform_indices = @transform_7, window_bounds = array<i64: 2, 2, 128>}]} {
    %c0 = arith.constant 0 : index
    %c0_0 = arith.constant 0 : index
    %c0_1 = arith.constant 0 : index
    %0 = vector.load %arg1[%c0, %c0_0, %c0_1] : memref<2x2x128xf32, #tpu.memory_space<vmem>>, vector<2x2x128xf32>
    %1 = vector.shape_cast %0 : vector<2x2x128xf32> to vector<16x32xf32>
    %c0_2 = arith.constant 0 : index
    %c0_3 = arith.constant 0 : index
    %2 = vector.load %arg4[%c0_2, %c0_3] : memref<32x32xf32, #tpu.memory_space<vmem>>, vector<32x32xf32>
    %cst = arith.constant dense<0.000000e+00> : vector<16x32xf32>
    %3 = tpu.matmul %1, %2, %cst {dimension_numbers = #tpu.dot_dimension_numbers<[1], [0], [0], [1], [0, 0, 1, 1], [], []>} : vector<16x32xf32>, vector<32x32xf32>, vector<16x32xf32> -> vector<16x32xf32>
    %4 = vector.shape_cast %3 : vector<16x32xf32> to vector<2x8x32xf32>
    %c0_4 = arith.constant 0 : index
    %c0_5 = arith.constant 0 : index
    %c0_6 = arith.constant 0 : index
    %5 = vector.load %arg2[%c0_4, %c0_5, %c0_6] : memref<2x2x128xf32, #tpu.memory_space<vmem>>, vector<2x2x128xf32>
    %6 = vector.shape_cast %5 : vector<2x2x128xf32> to vector<16x32xf32>
    %c0_7 = arith.constant 0 : index
    %c0_8 = arith.constant 0 : index
    %7 = vector.load %arg5[%c0_7, %c0_8] : memref<32x32xf32, #tpu.memory_space<vmem>>, vector<32x32xf32>
    %cst_9 = arith.constant dense<0.000000e+00> : vector<16x32xf32>
    %8 = tpu.matmul %6, %7, %cst_9 {dimension_numbers = #tpu.dot_dimension_numbers<[1], [0], [0], [1], [0, 0, 1, 1], [], []>} : vector<16x32xf32>, vector<32x32xf32>, vector<16x32xf32> -> vector<16x32xf32>
    %9 = vector.shape_cast %8 : vector<16x32xf32> to vector<2x8x32xf32>
    %c0_10 = arith.constant 0 : index
    %c0_11 = arith.constant 0 : index
    %c0_12 = arith.constant 0 : index
    %10 = vector.load %arg3[%c0_10, %c0_11, %c0_12] : memref<2x2x128xf32, #tpu.memory_space<vmem>>, vector<2x2x128xf32>
    %11 = vector.shape_cast %10 : vector<2x2x128xf32> to vector<16x32xf32>
    %c0_13 = arith.constant 0 : index
    %c0_14 = arith.constant 0 : index
    %12 = vector.load %arg5[%c0_13, %c0_14] : memref<32x32xf32, #tpu.memory_space<vmem>>, vector<32x32xf32>
    %cst_15 = arith.constant dense<0.000000e+00> : vector<16x32xf32>
    %13 = tpu.matmul %11, %12, %cst_15 {dimension_numbers = #tpu.dot_dimension_numbers<[1], [0], [0], [1], [0, 0, 1, 1], [], []>} : vector<16x32xf32>, vector<32x32xf32>, vector<16x32xf32> -> vector<16x32xf32>
    %14 = vector.shape_cast %13 : vector<16x32xf32> to vector<2x8x32xf32>
    %c0_16 = arith.constant 0 : index
    %c0_17 = arith.constant 0 : index
    %15 = vector.load %arg6[%c0_16, %c0_17] : memref<32x32xf32, #tpu.memory_space<vmem>>, vector<32x32xf32>
    %16 = tpu.iota {dimensions = array<i32: 2>} : vector<1x1x32xi32>
    %c16_i32 = arith.constant 16 : i32
    %17 = vector.broadcast %c16_i32 : i32 to vector<1x1x32xi32>
    %18 = arith.cmpi slt, %16, %17 : vector<1x1x32xi32>
    %cst_18 = arith.constant 0.000000e+00 : f32
    %19 = vector.shape_cast %18 : vector<1x1x32xi1> to vector<1x1x32xi1>
    %20 = vector.broadcast %19 : vector<1x1x32xi1> to vector<2x8x32xi1>
    %21 = vector.broadcast %cst_18 : f32 to vector<2x8x32xf32>
    %22 = arith.select %20, %9, %21 : vector<2x8x32xi1>, vector<2x8x32xf32>
    %23 = arith.subf %9, %22 : vector<2x8x32xf32>
    %cst_19 = arith.constant 0.000000e+00 : f32
    %24 = vector.shape_cast %18 : vector<1x1x32xi1> to vector<1x1x32xi1>
    %25 = vector.broadcast %24 : vector<1x1x32xi1> to vector<2x8x32xi1>
    %26 = vector.broadcast %cst_19 : f32 to vector<2x8x32xf32>
    %27 = arith.select %25, %14, %26 : vector<2x8x32xi1>, vector<2x8x32xf32>
    %28 = arith.subf %14, %27 : vector<2x8x32xf32>
    "tpu.trace_start"() <{level = 10 : i32, message = "bqd,bkd->bqk"}> : () -> ()
    %cst_20 = arith.constant dense<0.000000e+00> : vector<2x8x8xf32>
    %29 = tpu.matmul %4, %22, %cst_20 {dimension_numbers = #tpu.dot_dimension_numbers<[2], [2], [1], [1], [0, 0, 0, 1, 1, 1], [0], [0]>} : vector<2x8x32xf32>, vector<2x8x32xf32>, vector<2x8x8xf32> -> vector<2x8x8xf32>
    "tpu.trace_stop"() : () -> ()
    %cst_21 = arith.constant dense<0xFF800000> : vector<2x8xf32>
    %30 = vector.multi_reduction <maximumf>, %29, %cst_21 [2] : vector<2x8x8xf32> to vector<2x8xf32>
    %31 = vector.shape_cast %30 : vector<2x8xf32> to vector<2x8x1xf32>
    %32 = vector.broadcast %31 : vector<2x8x1xf32> to vector<2x8x8xf32>
    %33 = arith.subf %29, %32 : vector<2x8x8xf32>
    %34 = math.exp %33 : vector<2x8x8xf32>
    %cst_22 = arith.constant dense<0.000000e+00> : vector<2x8xf32>
    %35 = vector.multi_reduction <add>, %34, %cst_22 [2] : vector<2x8x8xf32> to vector<2x8xf32>
    %36 = vector.shape_cast %35 : vector<2x8xf32> to vector<2x8x1xf32>
    %37 = tpu.reciprocal %36 {approx = true} : vector<2x8x1xf32> -> vector<2x8x1xf32>
    %38 = arith.mulf %36, %37 : vector<2x8x1xf32>
    %cst_23 = arith.constant 2.000000e+00 : f32
    %39 = vector.broadcast %cst_23 : f32 to vector<2x8x1xf32>
    %40 = arith.subf %39, %38 : vector<2x8x1xf32>
    %41 = arith.mulf %37, %40 : vector<2x8x1xf32>
    %42 = vector.broadcast %41 : vector<2x8x1xf32> to vector<2x8x8xf32>
    %43 = arith.mulf %34, %42 : vector<2x8x8xf32>
    "tpu.trace_start"() <{level = 10 : i32, message = "bqk,bkd->bqd"}> : () -> ()
    %cst_24 = arith.constant dense<0.000000e+00> : vector<2x8x32xf32>
    %44 = tpu.matmul %43, %27, %cst_24 {dimension_numbers = #tpu.dot_dimension_numbers<[2], [1], [1], [2], [0, 0, 0, 1, 1, 2], [0], [0]>} : vector<2x8x8xf32>, vector<2x8x32xf32>, vector<2x8x32xf32> -> vector<2x8x32xf32>
    "tpu.trace_stop"() : () -> ()
    "tpu.trace_start"() <{level = 10 : i32, message = "bqd,bkd->bqk"}> : () -> ()
    %cst_25 = arith.constant dense<0.000000e+00> : vector<2x8x8xf32>
    %45 = tpu.matmul %4, %23, %cst_25 {dimension_numbers = #tpu.dot_dimension_numbers<[2], [2], [1], [1], [0, 0, 0, 1, 1, 1], [0], [0]>} : vector<2x8x32xf32>, vector<2x8x32xf32>, vector<2x8x8xf32> -> vector<2x8x8xf32>
    "tpu.trace_stop"() : () -> ()
    %cst_26 = arith.constant dense<0xFF800000> : vector<2x8xf32>
    %46 = vector.multi_reduction <maximumf>, %45, %cst_26 [2] : vector<2x8x8xf32> to vector<2x8xf32>
    %47 = vector.shape_cast %46 : vector<2x8xf32> to vector<2x8x1xf32>
    %48 = vector.broadcast %47 : vector<2x8x1xf32> to vector<2x8x8xf32>
    %49 = arith.subf %45, %48 : vector<2x8x8xf32>
    %50 = math.exp %49 : vector<2x8x8xf32>
    %cst_27 = arith.constant dense<0.000000e+00> : vector<2x8xf32>
    %51 = vector.multi_reduction <add>, %50, %cst_27 [2] : vector<2x8x8xf32> to vector<2x8xf32>
    %52 = vector.shape_cast %51 : vector<2x8xf32> to vector<2x8x1xf32>
    %53 = tpu.reciprocal %52 {approx = true} : vector<2x8x1xf32> -> vector<2x8x1xf32>
    %54 = arith.mulf %52, %53 : vector<2x8x1xf32>
    %cst_28 = arith.constant 2.000000e+00 : f32
    %55 = vector.broadcast %cst_28 : f32 to vector<2x8x1xf32>
    %56 = arith.subf %55, %54 : vector<2x8x1xf32>
    %57 = arith.mulf %53, %56 : vector<2x8x1xf32>
    %58 = vector.broadcast %57 : vector<2x8x1xf32> to vector<2x8x8xf32>
    %59 = arith.mulf %50, %58 : vector<2x8x8xf32>
    "tpu.trace_start"() <{level = 10 : i32, message = "bqk,bkd->bqd"}> : () -> ()
    %cst_29 = arith.constant dense<0.000000e+00> : vector<2x8x32xf32>
    %60 = tpu.matmul %59, %28, %cst_29 {dimension_numbers = #tpu.dot_dimension_numbers<[2], [1], [1], [2], [0, 0, 0, 1, 1, 2], [0], [0]>} : vector<2x8x8xf32>, vector<2x8x32xf32>, vector<2x8x32xf32> -> vector<2x8x32xf32>
    "tpu.trace_stop"() : () -> ()
    %61 = arith.addf %44, %60 : vector<2x8x32xf32>
    %62 = vector.shape_cast %61 : vector<2x8x32xf32> to vector<16x32xf32>
    %cst_30 = arith.constant dense<0.000000e+00> : vector<16x32xf32>
    %63 = tpu.matmul %62, %15, %cst_30 {dimension_numbers = #tpu.dot_dimension_numbers<[1], [0], [0], [1], [0, 0, 1, 1], [], []>} : vector<16x32xf32>, vector<32x32xf32>, vector<16x32xf32> -> vector<16x32xf32>
    %c0_31 = arith.constant 0 : index
    %c0_32 = arith.constant 0 : index
    %64 = vector.load %arg7[%c0_31, %c0_32] : memref<1x32xf32, #tpu.memory_space<vmem>>, vector<1x32xf32>
    %65 = vector.broadcast %64 : vector<1x32xf32> to vector<16x32xf32>
    %66 = arith.addf %63, %65 : vector<16x32xf32>
    %67 = vector.shape_cast %66 : vector<16x32xf32> to vector<2x2x128xf32>
    %c0_33 = arith.constant 0 : index
    %c0_34 = arith.constant 0 : index
    %c0_35 = arith.constant 0 : index
    %68 = vector.load %arg8[%c0_33, %c0_34, %c0_35] : memref<2x2x128xf32, #tpu.memory_space<vmem>>, vector<2x2x128xf32>
    tpu.vector_store %arg8[%c0_33, %c0_34, %c0_35], %67 {strides = array<i32>} : memref<2x2x128xf32, #tpu.memory_space<vmem>>, vector<2x2x128xf32>,
    return
  }
  func.func @transform_0(%arg0: i32) -> (i32, i32, i32) {
    %c0_i32 = arith.constant 0 : i32
    %c0_i32_0 = arith.constant 0 : i32
    %c0_i32_1 = arith.constant 0 : i32
    return %arg0, %c0_i32, %c0_i32_0 : i32, i32, i32
  }
  func.func @transform_1(%arg0: i32) -> (i32, i32, i32) {
    %c0_i32 = arith.constant 0 : i32
    %c0_i32_0 = arith.constant 0 : i32
    %c0_i32_1 = arith.constant 0 : i32
    return %arg0, %c0_i32, %c0_i32_0 : i32, i32, i32
  }
  func.func @transform_2(%arg0: i32) -> (i32, i32, i32) {
    %c0_i32 = arith.constant 0 : i32
    %c0_i32_0 = arith.constant 0 : i32
    %c0_i32_1 = arith.constant 0 : i32
    return %arg0, %c0_i32, %c0_i32_0 : i32, i32, i32
  }
  func.func @transform_3(%arg0: i32) -> (i32, i32) {
    %c0_i32 = arith.constant 0 : i32
    %c0_i32_0 = arith.constant 0 : i32
    %c0_i32_1 = arith.constant 0 : i32
    return %c0_i32, %c0_i32_0 : i32, i32
  }
  func.func @transform_4(%arg0: i32) -> (i32, i32) {
    %c0_i32 = arith.constant 0 : i32
    %c0_i32_0 = arith.constant 0 : i32
    %c0_i32_1 = arith.constant 0 : i32
    return %c0_i32, %c0_i32_0 : i32, i32
  }
  func.func @transform_5(%arg0: i32) -> (i32, i32) {
    %c0_i32 = arith.constant 0 : i32
    %c0_i32_0 = arith.constant 0 : i32
    %c0_i32_1 = arith.constant 0 : i32
    return %c0_i32, %c0_i32_0 : i32, i32
  }
  func.func @transform_6(%arg0: i32) -> (i32, i32) {
    %c0_i32 = arith.constant 0 : i32
    %c0_i32_0 = arith.constant 0 : i32
    %c0_i32_1 = arith.constant 0 : i32
    return %c0_i32, %c0_i32_0 : i32, i32
  }
  func.func @transform_7(%arg0: i32) -> (i32, i32, i32) {
    %c0_i32 = arith.constant 0 : i32
    %c0_i32_0 = arith.constant 0 : i32
    %c0_i32_1 = arith.constant 0 : i32
    return %arg0, %c0_i32, %c0_i32_0 : i32, i32, i32
  }
}

module attributes {stable_mosaic.version = 11 : i64} {
  func.func @wavelet_attn_kernel(%arg0: i32, %arg1: memref<2x8x32xf32, #tpu.memory_space<vmem>>, %arg2: memref<2x8x32xf32, #tpu.memory_space<vmem>>, %arg3: memref<2x8x32xf32, #tpu.memory_space<vmem>>, %arg4: memref<32x32xf32, #tpu.memory_space<vmem>>, %arg5: memref<32x32xf32, #tpu.memory_space<vmem>>, %arg6: memref<32x32xf32, #tpu.memory_space<vmem>>, %arg7: memref<1x32xf32, #tpu.memory_space<vmem>>, %arg8: memref<2x8x32xf32, #tpu.memory_space<vmem>>) attributes {dimension_semantics = [#tpu.dimension_semantics<parallel>], iteration_bounds = array<i64: 1>, scalar_prefetch = 0 : i64, scratch_operands = 0 : i64, tpu.core_type = #tpu.core_type<tc>, window_params = [{transform_indices = @transform_0, window_bounds = array<i64: 2, 8, 32>}, {transform_indices = @transform_1, window_bounds = array<i64: 2, 8, 32>}, {transform_indices = @transform_2, window_bounds = array<i64: 2, 8, 32>}, {pipeline_mode = #tpu.pipeline_mode<synchronous>, transform_indices = @transform_3, window_bounds = array<i64: 32, 32>}, {pipeline_mode = #tpu.pipeline_mode<synchronous>, transform_indices = @transform_4, window_bounds = array<i64: 32, 32>}, {pipeline_mode = #tpu.pipeline_mode<synchronous>, transform_indices = @transform_5, window_bounds = array<i64: 32, 32>}, {pipeline_mode = #tpu.pipeline_mode<synchronous>, transform_indices = @transform_6, window_bounds = array<i64: 1, 32>}, {transform_indices = @transform_7, window_bounds = array<i64: 2, 8, 32>}]} {
    %c0 = arith.constant 0 : index
    %c0_0 = arith.constant 0 : index
    %c0_1 = arith.constant 0 : index
    %0 = vector.load %arg1[%c0, %c0_0, %c0_1] : memref<2x8x32xf32, #tpu.memory_space<vmem>>, vector<2x8x32xf32>
    %1 = vector.shape_cast %0 : vector<2x8x32xf32> to vector<16x32xf32>
    %c0_2 = arith.constant 0 : index
    %c0_3 = arith.constant 0 : index
    %2 = vector.load %arg4[%c0_2, %c0_3] : memref<32x32xf32, #tpu.memory_space<vmem>>, vector<32x32xf32>
    %cst = arith.constant dense<0.000000e+00> : vector<16x32xf32>
    %3 = tpu.matmul %1, %2, %cst {dimension_numbers = #tpu.dot_dimension_numbers<[1], [0], [0], [1], [0, 0, 1, 1], [], []>} : vector<16x32xf32>, vector<32x32xf32>, vector<16x32xf32> -> vector<16x32xf32>
    %4 = vector.shape_cast %3 : vector<16x32xf32> to vector<2x8x32xf32>
    %c0_4 = arith.constant 0 : index
    %c0_5 = arith.constant 0 : index
    %c0_6 = arith.constant 0 : index
    %5 = vector.load %arg2[%c0_4, %c0_5, %c0_6] : memref<2x8x32xf32, #tpu.memory_space<vmem>>, vector<2x8x32xf32>
    %6 = vector.shape_cast %5 : vector<2x8x32xf32> to vector<16x32xf32>
    %c0_7 = arith.constant 0 : index
    %c0_8 = arith.constant 0 : index
    %7 = vector.load %arg5[%c0_7, %c0_8] : memref<32x32xf32, #tpu.memory_space<vmem>>, vector<32x32xf32>
    %cst_9 = arith.constant dense<0.000000e+00> : vector<16x32xf32>
    %8 = tpu.matmul %6, %7, %cst_9 {dimension_numbers = #tpu.dot_dimension_numbers<[1], [0], [0], [1], [0, 0, 1, 1], [], []>} : vector<16x32xf32>, vector<32x32xf32>, vector<16x32xf32> -> vector<16x32xf32>
    %9 = vector.shape_cast %8 : vector<16x32xf32> to vector<2x8x32xf32>
    %c0_10 = arith.constant 0 : index
    %c0_11 = arith.constant 0 : index
    %c0_12 = arith.constant 0 : index
    %10 = vector.load %arg3[%c0_10, %c0_11, %c0_12] : memref<2x8x32xf32, #tpu.memory_space<vmem>>, vector<2x8x32xf32>
    %11 = vector.shape_cast %10 : vector<2x8x32xf32> to vector<16x32xf32>
    %c0_13 = arith.constant 0 : index
    %c0_14 = arith.constant 0 : index
    %12 = vector.load %arg5[%c0_13, %c0_14] : memref<32x32xf32, #tpu.memory_space<vmem>>, vector<32x32xf32>
    %cst_15 = arith.constant dense<0.000000e+00> : vector<16x32xf32>
    %13 = tpu.matmul %11, %12, %cst_15 {dimension_numbers = #tpu.dot_dimension_numbers<[1], [0], [0], [1], [0, 0, 1, 1], [], []>} : vector<16x32xf32>, vector<32x32xf32>, vector<16x32xf32> -> vector<16x32xf32>
    %14 = vector.shape_cast %13 : vector<16x32xf32> to vector<2x8x32xf32>
    %c0_16 = arith.constant 0 : index
    %c0_17 = arith.constant 0 : index
    %15 = vector.load %arg6[%c0_16, %c0_17] : memref<32x32xf32, #tpu.memory_space<vmem>>, vector<32x32xf32>
    %16 = tpu.iota {dimensions = array<i32: 2>} : vector<1x1x32xi32>
    %c16_i32 = arith.constant 16 : i32
    %17 = vector.broadcast %c16_i32 : i32 to vector<1x1x32xi32>
    %18 = arith.cmpi slt, %16, %17 : vector<1x1x32xi32>
    %cst_18 = arith.constant 0.000000e+00 : f32
    %19 = vector.shape_cast %18 : vector<1x1x32xi1> to vector<1x1x32xi1>
    %20 = vector.broadcast %19 : vector<1x1x32xi1> to vector<2x8x32xi1>
    %21 = vector.broadcast %cst_18 : f32 to vector<2x8x32xf32>
    %22 = arith.select %20, %9, %21 : vector<2x8x32xi1>, vector<2x8x32xf32>
    %23 = arith.subf %9, %22 : vector<2x8x32xf32>
    %cst_19 = arith.constant 0.000000e+00 : f32
    %24 = vector.shape_cast %18 : vector<1x1x32xi1> to vector<1x1x32xi1>
    %25 = vector.broadcast %24 : vector<1x1x32xi1> to vector<2x8x32xi1>
    %26 = vector.broadcast %cst_19 : f32 to vector<2x8x32xf32>
    %27 = arith.select %25, %14, %26 : vector<2x8x32xi1>, vector<2x8x32xf32>
    %28 = arith.subf %14, %27 : vector<2x8x32xf32>
    "tpu.trace_start"() <{level = 10 : i32, message = "bqd,bkd->bqk"}> : () -> ()
    %cst_20 = arith.constant dense<0.000000e+00> : vector<2x8x8xf32>
    %29 = tpu.matmul %4, %22, %cst_20 {dimension_numbers = #tpu.dot_dimension_numbers<[2], [2], [1], [1], [0, 0, 0, 1, 1, 1], [0], [0]>} : vector<2x8x32xf32>, vector<2x8x32xf32>, vector<2x8x8xf32> -> vector<2x8x8xf32>
    "tpu.trace_stop"() : () -> ()
    %cst_21 = arith.constant dense<0xFF800000> : vector<2x8xf32>
    %30 = vector.multi_reduction <maximumf>, %29, %cst_21 [2] : vector<2x8x8xf32> to vector<2x8xf32>
    %31 = vector.shape_cast %30 : vector<2x8xf32> to vector<2x8x1xf32>
    %32 = vector.broadcast %31 : vector<2x8x1xf32> to vector<2x8x8xf32>
    %33 = arith.subf %29, %32 : vector<2x8x8xf32>
    %34 = math.exp %33 : vector<2x8x8xf32>
    %cst_22 = arith.constant dense<0.000000e+00> : vector<2x8xf32>
    %35 = vector.multi_reduction <add>, %34, %cst_22 [2] : vector<2x8x8xf32> to vector<2x8xf32>
    %36 = vector.shape_cast %35 : vector<2x8xf32> to vector<2x8x1xf32>
    %37 = tpu.reciprocal %36 {approx = true} : vector<2x8x1xf32> -> vector<2x8x1xf32>
    %38 = arith.mulf %36, %37 : vector<2x8x1xf32>
    %cst_23 = arith.constant 2.000000e+00 : f32
    %39 = vector.broadcast %cst_23 : f32 to vector<2x8x1xf32>
    %40 = arith.subf %39, %38 : vector<2x8x1xf32>
    %41 = arith.mulf %37, %40 : vector<2x8x1xf32>
    %42 = vector.broadcast %41 : vector<2x8x1xf32> to vector<2x8x8xf32>
    %43 = arith.mulf %34, %42 : vector<2x8x8xf32>
    "tpu.trace_start"() <{level = 10 : i32, message = "bqk,bkd->bqd"}> : () -> ()
    %cst_24 = arith.constant dense<0.000000e+00> : vector<2x8x32xf32>
    %44 = tpu.matmul %43, %27, %cst_24 {dimension_numbers = #tpu.dot_dimension_numbers<[2], [1], [1], [2], [0, 0, 0, 1, 1, 2], [0], [0]>} : vector<2x8x8xf32>, vector<2x8x32xf32>, vector<2x8x32xf32> -> vector<2x8x32xf32>
    "tpu.trace_stop"() : () -> ()
    "tpu.trace_start"() <{level = 10 : i32, message = "bqd,bkd->bqk"}> : () -> ()
    %cst_25 = arith.constant dense<0.000000e+00> : vector<2x8x8xf32>
    %45 = tpu.matmul %4, %23, %cst_25 {dimension_numbers = #tpu.dot_dimension_numbers<[2], [2], [1], [1], [0, 0, 0, 1, 1, 1], [0], [0]>} : vector<2x8x32xf32>, vector<2x8x32xf32>, vector<2x8x8xf32> -> vector<2x8x8xf32>
    "tpu.trace_stop"() : () -> ()
    %cst_26 = arith.constant dense<0xFF800000> : vector<2x8xf32>
    %46 = vector.multi_reduction <maximumf>, %45, %cst_26 [2] : vector<2x8x8xf32> to vector<2x8xf32>
    %47 = vector.shape_cast %46 : vector<2x8xf32> to vector<2x8x1xf32>
    %48 = vector.broadcast %47 : vector<2x8x1xf32> to vector<2x8x8xf32>
    %49 = arith.subf %45, %48 : vector<2x8x8xf32>
    %50 = math.exp %49 : vector<2x8x8xf32>
    %cst_27 = arith.constant dense<0.000000e+00> : vector<2x8xf32>
    %51 = vector.multi_reduction <add>, %50, %cst_27 [2] : vector<2x8x8xf32> to vector<2x8xf32>
    %52 = vector.shape_cast %51 : vector<2x8xf32> to vector<2x8x1xf32>
    %53 = tpu.reciprocal %52 {approx = true} : vector<2x8x1xf32> -> vector<2x8x1xf32>
    %54 = arith.mulf %52, %53 : vector<2x8x1xf32>
    %cst_28 = arith.constant 2.000000e+00 : f32
    %55 = vector.broadcast %cst_28 : f32 to vector<2x8x1xf32>
    %56 = arith.subf %55, %54 : vector<2x8x1xf32>
    %57 = arith.mulf %53, %56 : vector<2x8x1xf32>
    %58 = vector.broadcast %57 : vector<2x8x1xf32> to vector<2x8x8xf32>
    %59 = arith.mulf %50, %58 : vector<2x8x8xf32>
    "tpu.trace_start"() <{level = 10 : i32, message = "bqk,bkd->bqd"}> : () -> ()
    %cst_29 = arith.constant dense<0.000000e+00> : vector<2x8x32xf32>
    %60 = tpu.matmul %59, %28, %cst_29 {dimension_numbers = #tpu.dot_dimension_numbers<[2], [1], [1], [2], [0, 0, 0, 1, 1, 2], [0], [0]>} : vector<2x8x8xf32>, vector<2x8x32xf32>, vector<2x8x32xf32> -> vector<2x8x32xf32>
    "tpu.trace_stop"() : () -> ()
    %61 = arith.addf %44, %60 : vector<2x8x32xf32>
    %62 = vector.shape_cast %61 : vector<2x8x32xf32> to vector<16x32xf32>
    %cst_30 = arith.constant dense<0.000000e+00> : vector<16x32xf32>
    %63 = tpu.matmul %62, %15, %cst_30 {dimension_numbers = #tpu.dot_dimension_numbers<[1], [0], [0], [1], [0, 0, 1, 1], [], []>} : vector<16x32xf32>, vector<32x32xf32>, vector<16x32xf32> -> vector<16x32xf32>
    %c0_31 = arith.constant 0 : index
    %c0_32 = arith.constant 0 : index
    %64 = vector.load %arg7[%c0_31, %c0_32] : memref<1x32xf32, #tpu.memory_space<vmem>>, vector<1x32xf32>
    %65 = vector.broadcast %64 : vector<1x32xf32> to vector<16x32xf32>
    %66 = arith.addf %63, %65 : vector<16x32xf32>
    %67 = vector.shape_cast %66 : vector<16x32xf32> to vector<2x8x32xf32>
    %c0_33 = arith.constant 0 : index
    %c0_34 = arith.constant 0 : index
    %c0_35 = arith.constant 0 : index
    %68 = vector.load %arg8[%c0_33, %c0_34, %c0_35] : memref<2x8x32xf32, #tpu.memory_space<vmem>>, vector<2x8x32xf32>
    tpu.vector_store %arg8[%c0_33, %c0_34, %c0_35], %67 {strides = array<i32>} : memref<2x8x32xf32, #tpu.memory_space<vmem>>, vector<2x8x32xf32>,
    return
  }
  func.func @transform_0(%arg0: i32) -> (i32, i32, i32) {
    %c0_i32 = arith.constant 0 : i32
    %c0_i32_0 = arith.constant 0 : i32
    %c0_i32_1 = arith.constant 0 : i32
    return %arg0, %c0_i32, %c0_i32_0 : i32, i32, i32
  }
  func.func @transform_1(%arg0: i32) -> (i32, i32, i32) {
    %c0_i32 = arith.constant 0 : i32
    %c0_i32_0 = arith.constant 0 : i32
    %c0_i32_1 = arith.constant 0 : i32
    return %arg0, %c0_i32, %c0_i32_0 : i32, i32, i32
  }
  func.func @transform_2(%arg0: i32) -> (i32, i32, i32) {
    %c0_i32 = arith.constant 0 : i32
    %c0_i32_0 = arith.constant 0 : i32
    %c0_i32_1 = arith.constant 0 : i32
    return %arg0, %c0_i32, %c0_i32_0 : i32, i32, i32
  }
  func.func @transform_3(%arg0: i32) -> (i32, i32) {
    %c0_i32 = arith.constant 0 : i32
    %c0_i32_0 = arith.constant 0 : i32
    %c0_i32_1 = arith.constant 0 : i32
    return %c0_i32, %c0_i32_0 : i32, i32
  }
  func.func @transform_4(%arg0: i32) -> (i32, i32) {
    %c0_i32 = arith.constant 0 : i32
    %c0_i32_0 = arith.constant 0 : i32
    %c0_i32_1 = arith.constant 0 : i32
    return %c0_i32, %c0_i32_0 : i32, i32
  }
  func.func @transform_5(%arg0: i32) -> (i32, i32) {
    %c0_i32 = arith.constant 0 : i32
    %c0_i32_0 = arith.constant 0 : i32
    %c0_i32_1 = arith.constant 0 : i32
    return %c0_i32, %c0_i32_0 : i32, i32
  }
  func.func @transform_6(%arg0: i32) -> (i32, i32) {
    %c0_i32 = arith.constant 0 : i32
    %c0_i32_0 = arith.constant 0 : i32
    %c0_i32_1 = arith.constant 0 : i32
    return %c0_i32, %c0_i32_0 : i32, i32
  }
  func.func @transform_7(%arg0: i32) -> (i32, i32, i32) {
    %c0_i32 = arith.constant 0 : i32
    %c0_i32_0 = arith.constant 0 : i32
    %c0_i32_1 = arith.constant 0 : i32
    return %arg0, %c0_i32, %c0_i32_0 : i32, i32, i32
  }
}

</mosaic_0001>

<llo_original>
// kernel: tpu_custom_call.1
$region0: #{tpu_custom_call.1}
  #allocation0 [shape = 'u32[]', space=smem, size = 0x4, offset = 0x4, fixed_abs, tag = 'smem constant byte address 0x4 - core index']
  #allocation1 [shape = 'u32[144,128]{1,0:T(1,128)}', space=vmem, size = 0x12000, scoped, tag = 'internal scratch']
  %s0 = inlined_call_operand.hbm [shape: f32[2,8,32], index: 0, kind: input, shape index: {}]
  %s1 = inlined_call_operand.hbm [shape: f32[2,8,32], index: 1, kind: input, shape index: {}]
  %s2 = inlined_call_operand.hbm [shape: f32[2,8,32], index: 2, kind: input, shape index: {}]
  %s3 = inlined_call_operand.hbm [shape: f32[32,32], index: 3, kind: input, shape index: {}]
  %s4 = inlined_call_operand.hbm [shape: f32[32,32], index: 4, kind: input, shape index: {}]
  %s5 = inlined_call_operand.hbm [shape: f32[32,32], index: 5, kind: input, shape index: {}]
  %s6 = inlined_call_operand.vmem [shape: f32[1,32], index: 6, kind: input, shape index: {}]
  %s7 = inlined_call_operand.hbm [shape: f32[2,8,32], index: 7, kind: output, shape index: {}]
  %s8 = sld [smem:[#allocation0]]
  $region62: #{tpu_custom_call.1} parent=0
    _
  %s10 = ssub.s32 1, %s8
  %s11 = scalar_select 0, %s10, %s8
  $region1: #{tpu_custom_call.1} parent=0
    #allocation2 [shape = 'u8[8192]{0}', space=vmem, size = 0x2000, scoped, tag = 'input window, operand 0, single buffered']
    #allocation3 [shape = 's32[1]{0}', space=sflag, size = 0x4, scoped, tag = 'scoped memory for tpu_custom_call.1']
    #allocation4 [shape = 's32[1]{0}', space=sflag, size = 0x4, scoped, tag = 'scoped memory for tpu_custom_call.1']
    #allocation5 [shape = 'u8[8192]{0}', space=vmem, size = 0x2000, scoped, tag = 'input window, operand 1, single buffered']
    #allocation6 [shape = 's32[1]{0}', space=sflag, size = 0x4, scoped, tag = 'scoped memory for tpu_custom_call.1']
    #allocation7 [shape = 'u8[8192]{0}', space=vmem, size = 0x2000, scoped, tag = 'input window, operand 2, single buffered']
    #allocation8 [shape = 'u8[16384]{0}', space=vmem, size = 0x4000, scoped, tag = 'input window, operand 3, single buffered']
    #allocation9 [shape = 's32[1]{0}', space=sflag, size = 0x4, scoped, tag = 'scoped memory for tpu_custom_call.1']
    #allocation10 [shape = 'u8[16384]{0}', space=vmem, size = 0x4000, scoped, tag = 'input window, operand 4, single buffered']
    #allocation11 [shape = 'u8[16384]{0}', space=vmem, size = 0x4000, scoped, tag = 'input window, operand 5, single buffered']
    #allocation12 [shape = 's32[1]{0}', space=sflag, size = 0x4, scoped, tag = 'scoped memory for tpu_custom_call.1']
    #allocation13 [shape = 'u8[8192]{0}', space=vmem, size = 0x2000, scoped, tag = 'output window, operand 0, single buffered']
    %12 = vsyncpa [#allocation3], 0
    %13 = vsyncpa [#allocation6], 0
    %14 = vsyncpa [#allocation9], 0
    %15 = vsyncpa [#allocation12], 0
    %16 = vsyncpa [#allocation4], 0
    // Predicated region
    $region2: #{tpu_custom_call.1} parent=1 // pred_check
      _
    $region3: #{tpu_custom_call.1} parent=1 // pred_check_branch
      %18 = sbr.rel (0) target = $region5
    $region4: #{tpu_custom_call.1} parent=1 // pred_region
      %s20 = ssub.s32 256, 256
      %21 = vsyncadd [#allocation3], %s20
      %s22 = sshll.u32 [#allocation2], 4
      %s23 = int_to_ptr.vmem [resolvable:$true] %s22
      %28 = dma.hbm_to_vmem [thread:$0]  %s0, 256, %s23, [#allocation3], 128, 128, 8
    $region5: #{tpu_custom_call.1} parent=1 // pred_fallthru
      _
    // Predicated region
    $region6: #{tpu_custom_call.1} parent=1 // pred_check
      _
    $region7: #{tpu_custom_call.1} parent=1 // pred_check_branch
      %30 = sbr.rel (0) target = $region9
    $region8: #{tpu_custom_call.1} parent=1 // pred_region
      %s32 = ssub.s32 256, 256
      %33 = vsyncadd [#allocation6], %s32
      %s34 = sshll.u32 [#allocation5], 4
      %s35 = int_to_ptr.vmem [resolvable:$true] %s34
      %40 = dma.hbm_to_vmem [thread:$0]  %s1, 256, %s35, [#allocation6], 128, 128, 8
    $region9: #{tpu_custom_call.1} parent=1 // pred_fallthru
      _
    // Predicated region
    $region10: #{tpu_custom_call.1} parent=1 // pred_check
      _
    $region11: #{tpu_custom_call.1} parent=1 // pred_check_branch
      %42 = sbr.rel (0) target = $region13
    $region12: #{tpu_custom_call.1} parent=1 // pred_region
      %s44 = ssub.s32 256, 256
      %45 = vsyncadd [#allocation6], %s44
      %s46 = sshll.u32 [#allocation7], 4
      %s47 = int_to_ptr.vmem [resolvable:$true] %s46
      %52 = dma.hbm_to_vmem [thread:$0]  %s2, 256, %s47, [#allocation6], 128, 128, 8
    $region13: #{tpu_custom_call.1} parent=1 // pred_fallthru
      _
    // Predicated region
    $region14: #{tpu_custom_call.1} parent=1 // pred_check
      _
    $region15: #{tpu_custom_call.1} parent=1 // pred_check_branch
      %54 = sbr.rel (0) target = $region17
    $region16: #{tpu_custom_call.1} parent=1 // pred_region
      %s56 = ssub.s32 512, 512
      %57 = vsyncadd [#allocation9], %s56
      %s58 = sshll.u32 [#allocation8], 4
      %s59 = int_to_ptr.vmem [resolvable:$true] %s58
      %64 = dma.hbm_to_vmem [thread:$0]  %s3, 512, %s59, [#allocation9], 128, 128, 8
    $region17: #{tpu_custom_call.1} parent=1 // pred_fallthru
      _
    // Predicated region
    $region18: #{tpu_custom_call.1} parent=1 // pred_check
      _
    $region19: #{tpu_custom_call.1} parent=1 // pred_check_branch
      %66 = sbr.rel (0) target = $region21
    $region20: #{tpu_custom_call.1} parent=1 // pred_region
      %s68 = ssub.s32 512, 512
      %69 = vsyncadd [#allocation9], %s68
      %s70 = sshll.u32 [#allocation10], 4
      %s71 = int_to_ptr.vmem [resolvable:$true] %s70
      %76 = dma.hbm_to_vmem [thread:$0]  %s4, 512, %s71, [#allocation9], 128, 128, 8
    $region21: #{tpu_custom_call.1} parent=1 // pred_fallthru
      _
    // Predicated region
    $region22: #{tpu_custom_call.1} parent=1 // pred_check
      _
    $region23: #{tpu_custom_call.1} parent=1 // pred_check_branch
      %78 = sbr.rel (0) target = $region25
    $region24: #{tpu_custom_call.1} parent=1 // pred_region
      %s80 = ssub.s32 512, 512
      %81 = vsyncadd [#allocation12], %s80
      %s82 = sshll.u32 [#allocation11], 4
      %s83 = int_to_ptr.vmem [resolvable:$true] %s82
      %88 = dma.hbm_to_vmem [thread:$0]  %s5, 512, %s83, [#allocation12], 128, 128, 8
    $region25: #{tpu_custom_call.1} parent=1 // pred_fallthru
      _
    // Predicated region
    $region26: #{tpu_custom_call.1} parent=1 // pred_check
      _
    $region27: #{tpu_custom_call.1} parent=1 // pred_check_branch
      %90 = sbr.rel (0) target = $region29
    $region28: #{tpu_custom_call.1} parent=1 // pred_region
      _
    $region29: #{tpu_custom_call.1} parent=1 // pred_fallthru
      _
    // Predicated region
    $region30: #{tpu_custom_call.1} parent=1 // pred_check
      _
    $region31: #{tpu_custom_call.1} parent=1 // pred_check_branch
      %92 = sbr.rel (0) target = $region33
    $region32: #{tpu_custom_call.1} parent=1 // pred_region
      %93 = dma.done [#allocation3], 256
    $region33: #{tpu_custom_call.1} parent=1 // pred_fallthru
      _
    // Predicated region
    $region34: #{tpu_custom_call.1} parent=1 // pred_check
      _
    $region35: #{tpu_custom_call.1} parent=1 // pred_check_branch
      %95 = sbr.rel (0) target = $region37
    $region36: #{tpu_custom_call.1} parent=1 // pred_region
      %96 = dma.done [#allocation6], 256
    $region37: #{tpu_custom_call.1} parent=1 // pred_fallthru
      _
    // Predicated region
    $region38: #{tpu_custom_call.1} parent=1 // pred_check
      _
    $region39: #{tpu_custom_call.1} parent=1 // pred_check_branch
      %98 = sbr.rel (0) target = $region41
    $region40: #{tpu_custom_call.1} parent=1 // pred_region
      %99 = dma.done [#allocation6], 256
    $region41: #{tpu_custom_call.1} parent=1 // pred_fallthru
      _
    // Predicated region
    $region42: #{tpu_custom_call.1} parent=1 // pred_check
      _
    $region43: #{tpu_custom_call.1} parent=1 // pred_check_branch
      %101 = sbr.rel (0) target = $region45
    $region44: #{tpu_custom_call.1} parent=1 // pred_region
      %102 = dma.done [#allocation9], 512
    $region45: #{tpu_custom_call.1} parent=1 // pred_fallthru
      _
    // Predicated region
    $region46: #{tpu_custom_call.1} parent=1 // pred_check
      _
    $region47: #{tpu_custom_call.1} parent=1 // pred_check_branch
      %104 = sbr.rel (0) target = $region49
    $region48: #{tpu_custom_call.1} parent=1 // pred_region
      %105 = dma.done [#allocation9], 512
    $region49: #{tpu_custom_call.1} parent=1 // pred_fallthru
      _
    // Predicated region
    $region50: #{tpu_custom_call.1} parent=1 // pred_check
      _
    $region51: #{tpu_custom_call.1} parent=1 // pred_check_branch
      %107 = sbr.rel (0) target = $region53
    $region52: #{tpu_custom_call.1} parent=1 // pred_region
      %108 = dma.done [#allocation12], 512
    $region53: #{tpu_custom_call.1} parent=1 // pred_fallthru
      _
    %v109 = vld [vmem:[#allocation2] sm:$0xff]
    %v110 = vld [vmem:[#allocation2 + $0x8] sm:$0xff]
    %v111 = vld [vmem:[#allocation8] sm:$0xff]
    %v112 = vld [vmem:[#allocation8 + $0x8] sm:$0xff]
    %v113 = vld [vmem:[#allocation8 + $0x10] sm:$0xff]
    %v114 = vld [vmem:[#allocation8 + $0x18] sm:$0xff]
    %vm115 = vcmask 261120
    %v117 = vsel %vm115, %v109, 0
    %v120 = vsel %vm115, %v110, 0
    %122 = vmatprep.subr.mxu0 0.0
    %123 = vmatpush1.msra.mxu0 %v111
    %124 = vmatprep.subr.mxu0 0.0
    %125 = vmatpush1.msra.mxu0 %v112
    %126 = vmatprep.subr.mxu0 0.0
    %127 = vmatpush1.msra.mxu0 %v113
    %128 = vmatprep.subr.mxu0 0.0
    %129 = vmatpush1.msra.mxu0 %v114
    %130 = vmatprep.subr.mxu0 0.0
    %131 = vmatpush1.msra.mxu0 0.0
    %132 = vmatprep.subr.mxu0 0.0
    %133 = vmatpush1.msra.mxu0 0.0
    %134 = vmatprep.subr.mxu0 0.0
    %135 = vmatpush1.msra.mxu0 0.0
    %136 = vmatprep.subr.mxu0 0.0
    %137 = vmatpush1.msra.mxu0 0.0
    %138 = vmatprep.subr.mxu0 0.0
    %139 = vmatpush1.msra.mxu0 0.0
    %140 = vmatprep.subr.mxu0 0.0
    %141 = vmatpush1.msra.mxu0 0.0
    %142 = vmatprep.subr.mxu0 0.0
    %143 = vmatpush1.msra.mxu0 0.0
    %144 = vmatprep.subr.mxu0 0.0
    %145 = vmatpush1.msra.mxu0 0.0
    %146 = vmatprep.subr.mxu0 0.0
    %147 = vmatpush1.msra.mxu0 0.0
    %148 = vmatprep.subr.mxu0 0.0
    %149 = vmatpush1.msra.mxu0 0.0
    %150 = vmatprep.subr.mxu0 0.0
    %151 = vmatpush1.msra.mxu0 0.0
    %152 = vmatprep.subr.mxu0 0.0
    %153 = vmatpush1.msra.mxu0 0.0
    %154 = vmatprep.subr.mxu0 0.0
    %155 = vmatpush1.msra.mxu0 0.0
    %156 = vmatprep.subr.mxu0 0.0
    %157 = vmatpush1.msra.mxu0 0.0
    %158 = vmatprep.subr.mxu0 0.0
    %159 = vmatpush1.msra.mxu0 0.0
    %160 = vmatprep.subr.mxu0 0.0
    %161 = vmatpush1.msra.mxu0 0.0
    %162 = vmatprep.subr.mxu0 0.0
    %163 = vmatpush1.msra.mxu0 0.0
    %164 = vmatprep.subr.mxu0 0.0
    %165 = vmatpush1.msra.mxu0 0.0
    %166 = vmatprep.subr.mxu0 0.0
    %167 = vmatpush1.msra.mxu0 0.0
    %168 = vmatprep.subr.mxu0 0.0
    %169 = vmatpush1.msra.mxu0 0.0
    %170 = vmatprep.subr.mxu0 0.0
    %171 = vmatpush1.msra.mxu0 0.0
    %172 = vmatprep.subr.mxu0 0.0
    %173 = vmatpush1.msra.mxu0 0.0
    %174 = vmatprep.subr.mxu0 0.0
    %175 = vmatpush1.msra.mxu0 0.0
    %176 = vmatprep.subr.mxu0 0.0
    %177 = vmatpush1.msra.mxu0 0.0
    %178 = vmatprep.subr.mxu0 0.0
    %179 = vmatpush1.msra.mxu0 0.0
    %180 = vmatprep.subr.mxu0 0.0
    %181 = vmatpush1.msra.mxu0 0.0
    %182 = vmatprep.subr.mxu0 0.0
    %183 = vmatpush1.msra.mxu0 0.0
    %184 = vmatprep.subr.mxu0 0.0
    %185 = vmatpush1.msra.mxu0 0.0
    %186 = vmatprep.mubr.f32.mxu0 0.0
    %187 = vmatmul.mubr.f32.gmra.mrb[0].mxu0 %v117
    %v188 = vpop.f32.mrb[0].mxu0
    %v189 = vadd.f32 0.0, %v188
    %v190 = vpop.f32.mrb[0].mxu0
    %191 = vmatprep.mubr.f32.mxu0 0.0
    %192 = vmatmul.mubr.f32.gmra.mrb[0].mxu0 %v120
    %v193 = vpop.f32.mrb[0].mxu0
    %v194 = vadd.f32 0.0, %v193
    %v195 = vpop.f32.mrb[0].mxu0
    %196 = vdwg.mxu0
    %v197 = vld [vmem:[#allocation5] sm:$0xff]
    %v198 = vld [vmem:[#allocation5 + $0x8] sm:$0xff]
    %v199 = vld [vmem:[#allocation10] sm:$0xff]
    %v200 = vld [vmem:[#allocation10 + $0x8] sm:$0xff]
    %v201 = vld [vmem:[#allocation10 + $0x10] sm:$0xff]
    %v202 = vld [vmem:[#allocation10 + $0x18] sm:$0xff]
    %v204 = vsel %vm115, %v197, 0
    %v207 = vsel %vm115, %v198, 0
    %209 = vmatprep.subr.mxu0 0.0
    %210 = vmatpush1.msra.mxu0 %v199
    %211 = vmatprep.subr.mxu0 0.0
    %212 = vmatpush1.msra.mxu0 %v200
    %213 = vmatprep.subr.mxu0 0.0
    %214 = vmatpush1.msra.mxu0 %v201
    %215 = vmatprep.subr.mxu0 0.0
    %216 = vmatpush1.msra.mxu0 %v202
    %217 = vmatprep.subr.mxu0 0.0
    %218 = vmatpush1.msra.mxu0 0.0
    %219 = vmatprep.subr.mxu0 0.0
    %220 = vmatpush1.msra.mxu0 0.0
    %221 = vmatprep.subr.mxu0 0.0
    %222 = vmatpush1.msra.mxu0 0.0
    %223 = vmatprep.subr.mxu0 0.0
    %224 = vmatpush1.msra.mxu0 0.0
    %225 = vmatprep.subr.mxu0 0.0
    %226 = vmatpush1.msra.mxu0 0.0
    %227 = vmatprep.subr.mxu0 0.0
    %228 = vmatpush1.msra.mxu0 0.0
    %229 = vmatprep.subr.mxu0 0.0
    %230 = vmatpush1.msra.mxu0 0.0
    %231 = vmatprep.subr.mxu0 0.0
    %232 = vmatpush1.msra.mxu0 0.0
    %233 = vmatprep.subr.mxu0 0.0
    %234 = vmatpush1.msra.mxu0 0.0
    %235 = vmatprep.subr.mxu0 0.0
    %236 = vmatpush1.msra.mxu0 0.0
    %237 = vmatprep.subr.mxu0 0.0
    %238 = vmatpush1.msra.mxu0 0.0
    %239 = vmatprep.subr.mxu0 0.0
    %240 = vmatpush1.msra.mxu0 0.0
    %241 = vmatprep.subr.mxu0 0.0
    %242 = vmatpush1.msra.mxu0 0.0
    %243 = vmatprep.subr.mxu0 0.0
    %244 = vmatpush1.msra.mxu0 0.0
    %245 = vmatprep.subr.mxu0 0.0
    %246 = vmatpush1.msra.mxu0 0.0
    %247 = vmatprep.subr.mxu0 0.0
    %248 = vmatpush1.msra.mxu0 0.0
    %249 = vmatprep.subr.mxu0 0.0
    %250 = vmatpush1.msra.mxu0 0.0
    %251 = vmatprep.subr.mxu0 0.0
    %252 = vmatpush1.msra.mxu0 0.0
    %253 = vmatprep.subr.mxu0 0.0
    %254 = vmatpush1.msra.mxu0 0.0
    %255 = vmatprep.subr.mxu0 0.0
    %256 = vmatpush1.msra.mxu0 0.0
    %257 = vmatprep.subr.mxu0 0.0
    %258 = vmatpush1.msra.mxu0 0.0
    %259 = vmatprep.subr.mxu0 0.0
    %260 = vmatpush1.msra.mxu0 0.0
    %261 = vmatprep.subr.mxu0 0.0
    %262 = vmatpush1.msra.mxu0 0.0
    %263 = vmatprep.subr.mxu0 0.0
    %264 = vmatpush1.msra.mxu0 0.0
    %265 = vmatprep.subr.mxu0 0.0
    %266 = vmatpush1.msra.mxu0 0.0
    %267 = vmatprep.subr.mxu0 0.0
    %268 = vmatpush1.msra.mxu0 0.0
    %269 = vmatprep.subr.mxu0 0.0
    %270 = vmatpush1.msra.mxu0 0.0
    %271 = vmatprep.subr.mxu0 0.0
    %272 = vmatpush1.msra.mxu0 0.0
    %273 = vmatprep.mubr.f32.mxu0 0.0
    %274 = vmatmul.mubr.f32.gmra.mrb[0].mxu0 %v204
    %v275 = vpop.f32.mrb[0].mxu0
    %v276 = vadd.f32 0.0, %v275
    %v277 = vpop.f32.mrb[0].mxu0
    %278 = vmatprep.mubr.f32.mxu0 0.0
    %279 = vmatmul.mubr.f32.gmra.mrb[0].mxu0 %v207
    %v280 = vpop.f32.mrb[0].mxu0
    %v281 = vadd.f32 0.0, %v280
    %v282 = vpop.f32.mrb[0].mxu0
    %283 = vdwg.mxu0
    %v284 = vld [vmem:[#allocation7] sm:$0xff]
    %v285 = vld [vmem:[#allocation7 + $0x8] sm:$0xff]
    %v287 = vsel %vm115, %v284, 0
    %v290 = vsel %vm115, %v285, 0
    %292 = vmatprep.subr.mxu0 0.0
    %293 = vmatpush1.msra.mxu0 %v199
    %294 = vmatprep.subr.mxu0 0.0
    %295 = vmatpush1.msra.mxu0 %v200
    %296 = vmatprep.subr.mxu0 0.0
    %297 = vmatpush1.msra.mxu0 %v201
    %298 = vmatprep.subr.mxu0 0.0
    %299 = vmatpush1.msra.mxu0 %v202
    %300 = vmatprep.subr.mxu0 0.0
    %301 = vmatpush1.msra.mxu0 0.0
    %302 = vmatprep.subr.mxu0 0.0
    %303 = vmatpush1.msra.mxu0 0.0
    %304 = vmatprep.subr.mxu0 0.0
    %305 = vmatpush1.msra.mxu0 0.0
    %306 = vmatprep.subr.mxu0 0.0
    %307 = vmatpush1.msra.mxu0 0.0
    %308 = vmatprep.subr.mxu0 0.0
    %309 = vmatpush1.msra.mxu0 0.0
    %310 = vmatprep.subr.mxu0 0.0
    %311 = vmatpush1.msra.mxu0 0.0
    %312 = vmatprep.subr.mxu0 0.0
    %313 = vmatpush1.msra.mxu0 0.0
    %314 = vmatprep.subr.mxu0 0.0
    %315 = vmatpush1.msra.mxu0 0.0
    %316 = vmatprep.subr.mxu0 0.0
    %317 = vmatpush1.msra.mxu0 0.0
    %318 = vmatprep.subr.mxu0 0.0
    %319 = vmatpush1.msra.mxu0 0.0
    %320 = vmatprep.subr.mxu0 0.0
    %321 = vmatpush1.msra.mxu0 0.0
    %322 = vmatprep.subr.mxu0 0.0
    %323 = vmatpush1.msra.mxu0 0.0
    %324 = vmatprep.subr.mxu0 0.0
    %325 = vmatpush1.msra.mxu0 0.0
    %326 = vmatprep.subr.mxu0 0.0
    %327 = vmatpush1.msra.mxu0 0.0
    %328 = vmatprep.subr.mxu0 0.0
    %329 = vmatpush1.msra.mxu0 0.0
    %330 = vmatprep.subr.mxu0 0.0
    %331 = vmatpush1.msra.mxu0 0.0
    %332 = vmatprep.subr.mxu0 0.0
    %333 = vmatpush1.msra.mxu0 0.0
    %334 = vmatprep.subr.mxu0 0.0
    %335 = vmatpush1.msra.mxu0 0.0
    %336 = vmatprep.subr.mxu0 0.0
    %337 = vmatpush1.msra.mxu0 0.0
    %338 = vmatprep.subr.mxu0 0.0
    %339 = vmatpush1.msra.mxu0 0.0
    %340 = vmatprep.subr.mxu0 0.0
    %341 = vmatpush1.msra.mxu0 0.0
    %342 = vmatprep.subr.mxu0 0.0
    %343 = vmatpush1.msra.mxu0 0.0
    %344 = vmatprep.subr.mxu0 0.0
    %345 = vmatpush1.msra.mxu0 0.0
    %346 = vmatprep.subr.mxu0 0.0
    %347 = vmatpush1.msra.mxu0 0.0
    %348 = vmatprep.subr.mxu0 0.0
    %349 = vmatpush1.msra.mxu0 0.0
    %350 = vmatprep.subr.mxu0 0.0
    %351 = vmatpush1.msra.mxu0 0.0
    %352 = vmatprep.subr.mxu0 0.0
    %353 = vmatpush1.msra.mxu0 0.0
    %354 = vmatprep.subr.mxu0 0.0
    %355 = vmatpush1.msra.mxu0 0.0
    %356 = vmatprep.mubr.f32.mxu0 0.0
    %357 = vmatmul.mubr.f32.gmra.mrb[0].mxu0 %v287
    %v358 = vpop.f32.mrb[0].mxu0
    %v359 = vadd.f32 0.0, %v358
    %v360 = vpop.f32.mrb[0].mxu0
    %361 = vmatprep.mubr.f32.mxu0 0.0
    %362 = vmatmul.mubr.f32.gmra.mrb[0].mxu0 %v290
    %v363 = vpop.f32.mrb[0].mxu0
    %v364 = vadd.f32 0.0, %v363
    %v365 = vpop.f32.mrb[0].mxu0
    %366 = vdwg.mxu0
    %v367 = vld [vmem:[#allocation11] sm:$0xff]
    %v368 = vld [vmem:[#allocation11 + $0x8] sm:$0xff]
    %v369 = vld [vmem:[#allocation11 + $0x10] sm:$0xff]
    %v370 = vld [vmem:[#allocation11 + $0x18] sm:$0xff]
    %v371 = vlaneseq
    %v372 = vand.u32 %v371, 127
    %vm373 = vcmp.lt.s32.totalorder %v372, 16
    %v374 = vsel %vm373, 1, 0
    %vm375 = vcmp.eq.s32.totalorder %v374, 1
    %v376 = vsel %vm375, %v276, 0.0
    %v377 = vsel %vm375, %v281, 0.0
    %v378 = vsub.f32 %v276, %v376
    %v379 = vsub.f32 %v281, %v377
    %v380 = vsel %vm375, %v359, 0.0
    %v381 = vsel %vm375, %v364, 0.0
    %v382 = vsub.f32 %v359, %v380
    %v383 = vsub.f32 %v364, %v381
    %v385 = vsel %vm115, %v189, 0
    %v388 = vsel %vm115, %v376, 0
    %390 = vmatprep.subr.mxu0 0.0
    %391 = vmatpush1.xpose.msra.mxu0 %v388
    %392 = vmatprep.subr.mxu0 0.0
    %393 = vmatpush1.xpose.msra.mxu0 0.0
    %394 = vmatprep.subr.mxu0 0.0
    %395 = vmatpush1.xpose.msra.mxu0 0.0
    %396 = vmatprep.subr.mxu0 0.0
    %397 = vmatpush1.xpose.msra.mxu0 0.0
    %398 = vmatprep.subr.mxu0 0.0
    %399 = vmatpush1.xpose.msra.mxu0 0.0
    %400 = vmatprep.subr.mxu0 0.0
    %401 = vmatpush1.xpose.msra.mxu0 0.0
    %402 = vmatprep.subr.mxu0 0.0
    %403 = vmatpush1.xpose.msra.mxu0 0.0
    %404 = vmatprep.subr.mxu0 0.0
    %405 = vmatpush1.xpose.msra.mxu0 0.0
    %406 = vmatprep.subr.mxu0 0.0
    %407 = vmatpush1.xpose.msra.mxu0 0.0
    %408 = vmatprep.subr.mxu0 0.0
    %409 = vmatpush1.xpose.msra.mxu0 0.0
    %410 = vmatprep.subr.mxu0 0.0
    %411 = vmatpush1.xpose.msra.mxu0 0.0
    %412 = vmatprep.subr.mxu0 0.0
    %413 = vmatpush1.xpose.msra.mxu0 0.0
    %414 = vmatprep.subr.mxu0 0.0
    %415 = vmatpush1.xpose.msra.mxu0 0.0
    %416 = vmatprep.subr.mxu0 0.0
    %417 = vmatpush1.xpose.msra.mxu0 0.0
    %418 = vmatprep.subr.mxu0 0.0
    %419 = vmatpush1.xpose.msra.mxu0 0.0
    %420 = vmatprep.subr.mxu0 0.0
    %421 = vmatpush1.xpose.msra.mxu0 0.0
    %422 = vmatprep.subr.mxu0 0.0
    %423 = vmatpush1.xpose.msra.mxu0 0.0
    %424 = vmatprep.subr.mxu0 0.0
    %425 = vmatpush1.xpose.msra.mxu0 0.0
    %426 = vmatprep.subr.mxu0 0.0
    %427 = vmatpush1.xpose.msra.mxu0 0.0
    %428 = vmatprep.subr.mxu0 0.0
    %429 = vmatpush1.xpose.msra.mxu0 0.0
    %430 = vmatprep.subr.mxu0 0.0
    %431 = vmatpush1.xpose.msra.mxu0 0.0
    %432 = vmatprep.subr.mxu0 0.0
    %433 = vmatpush1.xpose.msra.mxu0 0.0
    %434 = vmatprep.subr.mxu0 0.0
    %435 = vmatpush1.xpose.msra.mxu0 0.0
    %436 = vmatprep.subr.mxu0 0.0
    %437 = vmatpush1.xpose.msra.mxu0 0.0
    %438 = vmatprep.subr.mxu0 0.0
    %439 = vmatpush1.xpose.msra.mxu0 0.0
    %440 = vmatprep.subr.mxu0 0.0
    %441 = vmatpush1.xpose.msra.mxu0 0.0
    %442 = vmatprep.subr.mxu0 0.0
    %443 = vmatpush1.xpose.msra.mxu0 0.0
    %444 = vmatprep.subr.mxu0 0.0
    %445 = vmatpush1.xpose.msra.mxu0 0.0
    %446 = vmatprep.subr.mxu0 0.0
    %447 = vmatpush1.xpose.msra.mxu0 0.0
    %448 = vmatprep.subr.mxu0 0.0
    %449 = vmatpush1.xpose.msra.mxu0 0.0
    %450 = vmatprep.subr.mxu0 0.0
    %451 = vmatpush1.xpose.msra.mxu0 0.0
    %452 = vmatprep.subr.mxu0 0.0
    %453 = vmatpush1.xpose.msra.mxu0 0.0
    %454 = vmatprep.mubr.f32.mxu0 0.0
    %455 = vmatmul.mubr.f32.gmra.mrb[0].mxu0 %v385
    %v456 = vpop.f32.mrb[0].mxu0
    %v457 = vadd.f32 0.0, %v456
    %v458 = vpop.f32.mrb[0].mxu0
    %459 = vdwg.mxu0
    %v461 = vsel %vm115, %v194, 0
    %v464 = vsel %vm115, %v377, 0
    %466 = vmatprep.subr.mxu0 0.0
    %467 = vmatpush1.xpose.msra.mxu0 %v464
    %468 = vmatprep.subr.mxu0 0.0
    %469 = vmatpush1.xpose.msra.mxu0 0.0
    %470 = vmatprep.subr.mxu0 0.0
    %471 = vmatpush1.xpose.msra.mxu0 0.0
    %472 = vmatprep.subr.mxu0 0.0
    %473 = vmatpush1.xpose.msra.mxu0 0.0
    %474 = vmatprep.subr.mxu0 0.0
    %475 = vmatpush1.xpose.msra.mxu0 0.0
    %476 = vmatprep.subr.mxu0 0.0
    %477 = vmatpush1.xpose.msra.mxu0 0.0
    %478 = vmatprep.subr.mxu0 0.0
    %479 = vmatpush1.xpose.msra.mxu0 0.0
    %480 = vmatprep.subr.mxu0 0.0
    %481 = vmatpush1.xpose.msra.mxu0 0.0
    %482 = vmatprep.subr.mxu0 0.0
    %483 = vmatpush1.xpose.msra.mxu0 0.0
    %484 = vmatprep.subr.mxu0 0.0
    %485 = vmatpush1.xpose.msra.mxu0 0.0
    %486 = vmatprep.subr.mxu0 0.0
    %487 = vmatpush1.xpose.msra.mxu0 0.0
    %488 = vmatprep.subr.mxu0 0.0
    %489 = vmatpush1.xpose.msra.mxu0 0.0
    %490 = vmatprep.subr.mxu0 0.0
    %491 = vmatpush1.xpose.msra.mxu0 0.0
    %492 = vmatprep.subr.mxu0 0.0
    %493 = vmatpush1.xpose.msra.mxu0 0.0
    %494 = vmatprep.subr.mxu0 0.0
    %495 = vmatpush1.xpose.msra.mxu0 0.0
    %496 = vmatprep.subr.mxu0 0.0
    %497 = vmatpush1.xpose.msra.mxu0 0.0
    %498 = vmatprep.subr.mxu0 0.0
    %499 = vmatpush1.xpose.msra.mxu0 0.0
    %500 = vmatprep.subr.mxu0 0.0
    %501 = vmatpush1.xpose.msra.mxu0 0.0
    %502 = vmatprep.subr.mxu0 0.0
    %503 = vmatpush1.xpose.msra.mxu0 0.0
    %504 = vmatprep.subr.mxu0 0.0
    %505 = vmatpush1.xpose.msra.mxu0 0.0
    %506 = vmatprep.subr.mxu0 0.0
    %507 = vmatpush1.xpose.msra.mxu0 0.0
    %508 = vmatprep.subr.mxu0 0.0
    %509 = vmatpush1.xpose.msra.mxu0 0.0
    %510 = vmatprep.subr.mxu0 0.0
    %511 = vmatpush1.xpose.msra.mxu0 0.0
    %512 = vmatprep.subr.mxu0 0.0
    %513 = vmatpush1.xpose.msra.mxu0 0.0
    %514 = vmatprep.subr.mxu0 0.0
    %515 = vmatpush1.xpose.msra.mxu0 0.0
    %516 = vmatprep.subr.mxu0 0.0
    %517 = vmatpush1.xpose.msra.mxu0 0.0
    %518 = vmatprep.subr.mxu0 0.0
    %519 = vmatpush1.xpose.msra.mxu0 0.0
    %520 = vmatprep.subr.mxu0 0.0
    %521 = vmatpush1.xpose.msra.mxu0 0.0
    %522 = vmatprep.subr.mxu0 0.0
    %523 = vmatpush1.xpose.msra.mxu0 0.0
    %524 = vmatprep.subr.mxu0 0.0
    %525 = vmatpush1.xpose.msra.mxu0 0.0
    %526 = vmatprep.subr.mxu0 0.0
    %527 = vmatpush1.xpose.msra.mxu0 0.0
    %528 = vmatprep.subr.mxu0 0.0
    %529 = vmatpush1.xpose.msra.mxu0 0.0
    %530 = vmatprep.mubr.f32.mxu0 0.0
    %531 = vmatmul.mubr.f32.gmra.mrb[0].mxu0 %v461
    %v532 = vpop.f32.mrb[0].mxu0
    %v533 = vadd.f32 0.0, %v532
    %v534 = vpop.f32.mrb[0].mxu0
    %535 = vdwg.mxu0
    %vm536 = vcmask 64512
    %v537 = vsel %vm536, %v457, -inf
    %538 = vmax.xlane.f32.xlu0 %v537
    %v539 = vpop.xlane.xlu0 %538
    %v540 = vsel %vm536, %v533, -inf
    %541 = vmax.xlane.f32.xlu0 %v540
    %v542 = vpop.xlane.xlu0 %541
    %v543 = vsub.f32 %v457, %v539
    %v544 = vsub.f32 %v533, %v542
    %v545 = vmul.f32 %v543, 1.442695
    %v546 = vpow.pop %v545
    %v547 = vmul.f32 %v544, 1.442695
    %v548 = vpow.pop %v547
    %v549 = vsel %vm536, %v546, 0.0
    %550 = vadd.xlane.f32.xlu0 %v549
    %v551 = vpop.xlane.xlu0 %550
    %v552 = vsel %vm536, %v548, 0.0
    %553 = vadd.xlane.f32.xlu0 %v552
    %v554 = vpop.xlane.xlu0 %553
    %v555 = vrcp.pop %v551
    %v556 = vrcp.pop %v554
    %v557 = vmul.f32 %v551, %v555
    %v558 = vmul.f32 %v554, %v556
    %v559 = vsub.f32 2.0, %v557
    %v560 = vsub.f32 2.0, %v558
    %v561 = vmul.f32 %v555, %v559
    %v562 = vmul.f32 %v556, %v560
    %v563 = vmul.f32 %v546, %v561
    %v564 = vmul.f32 %v548, %v562
    %v566 = vsel %vm115, %v378, 0
    %568 = vmatprep.subr.mxu0 0.0
    %569 = vmatpush1.xpose.msra.mxu0 %v566
    %570 = vmatprep.subr.mxu0 0.0
    %571 = vmatpush1.xpose.msra.mxu0 0.0
    %572 = vmatprep.subr.mxu0 0.0
    %573 = vmatpush1.xpose.msra.mxu0 0.0
    %574 = vmatprep.subr.mxu0 0.0
    %575 = vmatpush1.xpose.msra.mxu0 0.0
    %576 = vmatprep.subr.mxu0 0.0
    %577 = vmatpush1.xpose.msra.mxu0 0.0
    %578 = vmatprep.subr.mxu0 0.0
    %579 = vmatpush1.xpose.msra.mxu0 0.0
    %580 = vmatprep.subr.mxu0 0.0
    %581 = vmatpush1.xpose.msra.mxu0 0.0
    %582 = vmatprep.subr.mxu0 0.0
    %583 = vmatpush1.xpose.msra.mxu0 0.0
    %584 = vmatprep.subr.mxu0 0.0
    %585 = vmatpush1.xpose.msra.mxu0 0.0
    %586 = vmatprep.subr.mxu0 0.0
    %587 = vmatpush1.xpose.msra.mxu0 0.0
    %588 = vmatprep.subr.mxu0 0.0
    %589 = vmatpush1.xpose.msra.mxu0 0.0
    %590 = vmatprep.subr.mxu0 0.0
    %591 = vmatpush1.xpose.msra.mxu0 0.0
    %592 = vmatprep.subr.mxu0 0.0
    %593 = vmatpush1.xpose.msra.mxu0 0.0
    %594 = vmatprep.subr.mxu0 0.0
    %595 = vmatpush1.xpose.msra.mxu0 0.0
    %596 = vmatprep.subr.mxu0 0.0
    %597 = vmatpush1.xpose.msra.mxu0 0.0
    %598 = vmatprep.subr.mxu0 0.0
    %599 = vmatpush1.xpose.msra.mxu0 0.0
    %600 = vmatprep.subr.mxu0 0.0
    %601 = vmatpush1.xpose.msra.mxu0 0.0
    %602 = vmatprep.subr.mxu0 0.0
    %603 = vmatpush1.xpose.msra.mxu0 0.0
    %604 = vmatprep.subr.mxu0 0.0
    %605 = vmatpush1.xpose.msra.mxu0 0.0
    %606 = vmatprep.subr.mxu0 0.0
    %607 = vmatpush1.xpose.msra.mxu0 0.0
    %608 = vmatprep.subr.mxu0 0.0
    %609 = vmatpush1.xpose.msra.mxu0 0.0
    %610 = vmatprep.subr.mxu0 0.0
    %611 = vmatpush1.xpose.msra.mxu0 0.0
    %612 = vmatprep.subr.mxu0 0.0
    %613 = vmatpush1.xpose.msra.mxu0 0.0
    %614 = vmatprep.subr.mxu0 0.0
    %615 = vmatpush1.xpose.msra.mxu0 0.0
    %616 = vmatprep.subr.mxu0 0.0
    %617 = vmatpush1.xpose.msra.mxu0 0.0
    %618 = vmatprep.subr.mxu0 0.0
    %619 = vmatpush1.xpose.msra.mxu0 0.0
    %620 = vmatprep.subr.mxu0 0.0
    %621 = vmatpush1.xpose.msra.mxu0 0.0
    %622 = vmatprep.subr.mxu0 0.0
    %623 = vmatpush1.xpose.msra.mxu0 0.0
    %624 = vmatprep.subr.mxu0 0.0
    %625 = vmatpush1.xpose.msra.mxu0 0.0
    %626 = vmatprep.subr.mxu0 0.0
    %627 = vmatpush1.xpose.msra.mxu0 0.0
    %628 = vmatprep.subr.mxu0 0.0
    %629 = vmatpush1.xpose.msra.mxu0 0.0
    %630 = vmatprep.subr.mxu0 0.0
    %631 = vmatpush1.xpose.msra.mxu0 0.0
    %632 = vmatprep.mubr.f32.mxu0 0.0
    %633 = vmatmul.mubr.f32.gmra.mrb[0].mxu0 %v385
    %v634 = vpop.f32.mrb[0].mxu0
    %v635 = vadd.f32 0.0, %v634
    %v636 = vpop.f32.mrb[0].mxu0
    %637 = vdwg.mxu0
    %v639 = vsel %vm115, %v379, 0
    %641 = vmatprep.subr.mxu0 0.0
    %642 = vmatpush1.xpose.msra.mxu0 %v639
    %643 = vmatprep.subr.mxu0 0.0
    %644 = vmatpush1.xpose.msra.mxu0 0.0
    %645 = vmatprep.subr.mxu0 0.0
    %646 = vmatpush1.xpose.msra.mxu0 0.0
    %647 = vmatprep.subr.mxu0 0.0
    %648 = vmatpush1.xpose.msra.mxu0 0.0
    %649 = vmatprep.subr.mxu0 0.0
    %650 = vmatpush1.xpose.msra.mxu0 0.0
    %651 = vmatprep.subr.mxu0 0.0
    %652 = vmatpush1.xpose.msra.mxu0 0.0
    %653 = vmatprep.subr.mxu0 0.0
    %654 = vmatpush1.xpose.msra.mxu0 0.0
    %655 = vmatprep.subr.mxu0 0.0
    %656 = vmatpush1.xpose.msra.mxu0 0.0
    %657 = vmatprep.subr.mxu0 0.0
    %658 = vmatpush1.xpose.msra.mxu0 0.0
    %659 = vmatprep.subr.mxu0 0.0
    %660 = vmatpush1.xpose.msra.mxu0 0.0
    %661 = vmatprep.subr.mxu0 0.0
    %662 = vmatpush1.xpose.msra.mxu0 0.0
    %663 = vmatprep.subr.mxu0 0.0
    %664 = vmatpush1.xpose.msra.mxu0 0.0
    %665 = vmatprep.subr.mxu0 0.0
    %666 = vmatpush1.xpose.msra.mxu0 0.0
    %667 = vmatprep.subr.mxu0 0.0
    %668 = vmatpush1.xpose.msra.mxu0 0.0
    %669 = vmatprep.subr.mxu0 0.0
    %670 = vmatpush1.xpose.msra.mxu0 0.0
    %671 = vmatprep.subr.mxu0 0.0
    %672 = vmatpush1.xpose.msra.mxu0 0.0
    %673 = vmatprep.subr.mxu0 0.0
    %674 = vmatpush1.xpose.msra.mxu0 0.0
    %675 = vmatprep.subr.mxu0 0.0
    %676 = vmatpush1.xpose.msra.mxu0 0.0
    %677 = vmatprep.subr.mxu0 0.0
    %678 = vmatpush1.xpose.msra.mxu0 0.0
    %679 = vmatprep.subr.mxu0 0.0
    %680 = vmatpush1.xpose.msra.mxu0 0.0
    %681 = vmatprep.subr.mxu0 0.0
    %682 = vmatpush1.xpose.msra.mxu0 0.0
    %683 = vmatprep.subr.mxu0 0.0
    %684 = vmatpush1.xpose.msra.mxu0 0.0
    %685 = vmatprep.subr.mxu0 0.0
    %686 = vmatpush1.xpose.msra.mxu0 0.0
    %687 = vmatprep.subr.mxu0 0.0
    %688 = vmatpush1.xpose.msra.mxu0 0.0
    %689 = vmatprep.subr.mxu0 0.0
    %690 = vmatpush1.xpose.msra.mxu0 0.0
    %691 = vmatprep.subr.mxu0 0.0
    %692 = vmatpush1.xpose.msra.mxu0 0.0
    %693 = vmatprep.subr.mxu0 0.0
    %694 = vmatpush1.xpose.msra.mxu0 0.0
    %695 = vmatprep.subr.mxu0 0.0
    %696 = vmatpush1.xpose.msra.mxu0 0.0
    %697 = vmatprep.subr.mxu0 0.0
    %698 = vmatpush1.xpose.msra.mxu0 0.0
    %699 = vmatprep.subr.mxu0 0.0
    %700 = vmatpush1.xpose.msra.mxu0 0.0
    %701 = vmatprep.subr.mxu0 0.0
    %702 = vmatpush1.xpose.msra.mxu0 0.0
    %703 = vmatprep.subr.mxu0 0.0
    %704 = vmatpush1.xpose.msra.mxu0 0.0
    %705 = vmatprep.mubr.f32.mxu0 0.0
    %706 = vmatmul.mubr.f32.gmra.mrb[0].mxu0 %v461
    %v707 = vpop.f32.mrb[0].mxu0
    %v708 = vadd.f32 0.0, %v707
    %v709 = vpop.f32.mrb[0].mxu0
    %710 = vdwg.mxu0
    %v711 = vsel %vm536, %v635, -inf
    %712 = vmax.xlane.f32.xlu0 %v711
    %v713 = vpop.xlane.xlu0 %712
    %v714 = vsel %vm536, %v708, -inf
    %715 = vmax.xlane.f32.xlu0 %v714
    %v716 = vpop.xlane.xlu0 %715
    %v717 = vsub.f32 %v635, %v713
    %v718 = vsub.f32 %v708, %v716
    %v719 = vmul.f32 %v717, 1.442695
    %v720 = vpow.pop %v719
    %v721 = vmul.f32 %v718, 1.442695
    %v722 = vpow.pop %v721
    %v723 = vsel %vm536, %v720, 0.0
    %724 = vadd.xlane.f32.xlu0 %v723
    %v725 = vpop.xlane.xlu0 %724
    %v726 = vsel %vm536, %v722, 0.0
    %727 = vadd.xlane.f32.xlu0 %v726
    %v728 = vpop.xlane.xlu0 %727
    %v729 = vrcp.pop %v725
    %v730 = vrcp.pop %v728
    %v731 = vmul.f32 %v725, %v729
    %v732 = vmul.f32 %v728, %v730
    %v733 = vsub.f32 2.0, %v731
    %v734 = vsub.f32 2.0, %v732
    %v735 = vmul.f32 %v729, %v733
    %v736 = vmul.f32 %v730, %v734
    %v737 = vmul.f32 %v720, %v735
    %v738 = vmul.f32 %v722, %v736
    %v740 = vsel %vm536, %v737, 0
    %742 = vmatprep.subr.mxu0 0.0
    %743 = vmatpush1.msra.mxu0 %v382
    %744 = vmatprep.subr.mxu0 0.0
    %745 = vmatpush1.msra.mxu0 0.0
    %746 = vmatprep.subr.mxu0 0.0
    %747 = vmatpush1.msra.mxu0 0.0
    %748 = vmatprep.subr.mxu0 0.0
    %749 = vmatpush1.msra.mxu0 0.0
    %750 = vmatprep.subr.mxu0 0.0
    %751 = vmatpush1.msra.mxu0 0.0
    %752 = vmatprep.subr.mxu0 0.0
    %753 = vmatpush1.msra.mxu0 0.0
    %754 = vmatprep.subr.mxu0 0.0
    %755 = vmatpush1.msra.mxu0 0.0
    %756 = vmatprep.subr.mxu0 0.0
    %757 = vmatpush1.msra.mxu0 0.0
    %758 = vmatprep.subr.mxu0 0.0
    %759 = vmatpush1.msra.mxu0 0.0
    %760 = vmatprep.subr.mxu0 0.0
    %761 = vmatpush1.msra.mxu0 0.0
    %762 = vmatprep.subr.mxu0 0.0
    %763 = vmatpush1.msra.mxu0 0.0
    %764 = vmatprep.subr.mxu0 0.0
    %765 = vmatpush1.msra.mxu0 0.0
    %766 = vmatprep.subr.mxu0 0.0
    %767 = vmatpush1.msra.mxu0 0.0
    %768 = vmatprep.subr.mxu0 0.0
    %769 = vmatpush1.msra.mxu0 0.0
    %770 = vmatprep.subr.mxu0 0.0
    %771 = vmatpush1.msra.mxu0 0.0
    %772 = vmatprep.subr.mxu0 0.0
    %773 = vmatpush1.msra.mxu0 0.0
    %774 = vmatprep.subr.mxu0 0.0
    %775 = vmatpush1.msra.mxu0 0.0
    %776 = vmatprep.subr.mxu0 0.0
    %777 = vmatpush1.msra.mxu0 0.0
    %778 = vmatprep.subr.mxu0 0.0
    %779 = vmatpush1.msra.mxu0 0.0
    %780 = vmatprep.subr.mxu0 0.0
    %781 = vmatpush1.msra.mxu0 0.0
    %782 = vmatprep.subr.mxu0 0.0
    %783 = vmatpush1.msra.mxu0 0.0
    %784 = vmatprep.subr.mxu0 0.0
    %785 = vmatpush1.msra.mxu0 0.0
    %786 = vmatprep.subr.mxu0 0.0
    %787 = vmatpush1.msra.mxu0 0.0
    %788 = vmatprep.subr.mxu0 0.0
    %789 = vmatpush1.msra.mxu0 0.0
    %790 = vmatprep.subr.mxu0 0.0
    %791 = vmatpush1.msra.mxu0 0.0
    %792 = vmatprep.subr.mxu0 0.0
    %793 = vmatpush1.msra.mxu0 0.0
    %794 = vmatprep.subr.mxu0 0.0
    %795 = vmatpush1.msra.mxu0 0.0
    %796 = vmatprep.subr.mxu0 0.0
    %797 = vmatpush1.msra.mxu0 0.0
    %798 = vmatprep.subr.mxu0 0.0
    %799 = vmatpush1.msra.mxu0 0.0
    %800 = vmatprep.subr.mxu0 0.0
    %801 = vmatpush1.msra.mxu0 0.0
    %802 = vmatprep.subr.mxu0 0.0
    %803 = vmatpush1.msra.mxu0 0.0
    %804 = vmatprep.subr.mxu0 0.0
    %805 = vmatpush1.msra.mxu0 0.0
    %806 = vmatprep.mubr.f32.mxu0 0.0
    %807 = vmatmul.mubr.f32.gmra.mrb[0].mxu0 %v740
    %v808 = vpop.f32.mrb[0].mxu0
    %v809 = vadd.f32 0.0, %v808
    %v810 = vpop.f32.mrb[0].mxu0
    %811 = vdwg.mxu0
    %v813 = vsel %vm536, %v738, 0
    %815 = vmatprep.subr.mxu0 0.0
    %816 = vmatpush1.msra.mxu0 %v383
    %817 = vmatprep.subr.mxu0 0.0
    %818 = vmatpush1.msra.mxu0 0.0
    %819 = vmatprep.subr.mxu0 0.0
    %820 = vmatpush1.msra.mxu0 0.0
    %821 = vmatprep.subr.mxu0 0.0
    %822 = vmatpush1.msra.mxu0 0.0
    %823 = vmatprep.subr.mxu0 0.0
    %824 = vmatpush1.msra.mxu0 0.0
    %825 = vmatprep.subr.mxu0 0.0
    %826 = vmatpush1.msra.mxu0 0.0
    %827 = vmatprep.subr.mxu0 0.0
    %828 = vmatpush1.msra.mxu0 0.0
    %829 = vmatprep.subr.mxu0 0.0
    %830 = vmatpush1.msra.mxu0 0.0
    %831 = vmatprep.subr.mxu0 0.0
    %832 = vmatpush1.msra.mxu0 0.0
    %833 = vmatprep.subr.mxu0 0.0
    %834 = vmatpush1.msra.mxu0 0.0
    %835 = vmatprep.subr.mxu0 0.0
    %836 = vmatpush1.msra.mxu0 0.0
    %837 = vmatprep.subr.mxu0 0.0
    %838 = vmatpush1.msra.mxu0 0.0
    %839 = vmatprep.subr.mxu0 0.0
    %840 = vmatpush1.msra.mxu0 0.0
    %841 = vmatprep.subr.mxu0 0.0
    %842 = vmatpush1.msra.mxu0 0.0
    %843 = vmatprep.subr.mxu0 0.0
    %844 = vmatpush1.msra.mxu0 0.0
    %845 = vmatprep.subr.mxu0 0.0
    %846 = vmatpush1.msra.mxu0 0.0
    %847 = vmatprep.subr.mxu0 0.0
    %848 = vmatpush1.msra.mxu0 0.0
    %849 = vmatprep.subr.mxu0 0.0
    %850 = vmatpush1.msra.mxu0 0.0
    %851 = vmatprep.subr.mxu0 0.0
    %852 = vmatpush1.msra.mxu0 0.0
    %853 = vmatprep.subr.mxu0 0.0
    %854 = vmatpush1.msra.mxu0 0.0
    %855 = vmatprep.subr.mxu0 0.0
    %856 = vmatpush1.msra.mxu0 0.0
    %857 = vmatprep.subr.mxu0 0.0
    %858 = vmatpush1.msra.mxu0 0.0
    %859 = vmatprep.subr.mxu0 0.0
    %860 = vmatpush1.msra.mxu0 0.0
    %861 = vmatprep.subr.mxu0 0.0
    %862 = vmatpush1.msra.mxu0 0.0
    %863 = vmatprep.subr.mxu0 0.0
    %864 = vmatpush1.msra.mxu0 0.0
    %865 = vmatprep.subr.mxu0 0.0
    %866 = vmatpush1.msra.mxu0 0.0
    %867 = vmatprep.subr.mxu0 0.0
    %868 = vmatpush1.msra.mxu0 0.0
    %869 = vmatprep.subr.mxu0 0.0
    %870 = vmatpush1.msra.mxu0 0.0
    %871 = vmatprep.subr.mxu0 0.0
    %872 = vmatpush1.msra.mxu0 0.0
    %873 = vmatprep.subr.mxu0 0.0
    %874 = vmatpush1.msra.mxu0 0.0
    %875 = vmatprep.subr.mxu0 0.0
    %876 = vmatpush1.msra.mxu0 0.0
    %877 = vmatprep.subr.mxu0 0.0
    %878 = vmatpush1.msra.mxu0 0.0
    %879 = vmatprep.mubr.f32.mxu0 0.0
    %880 = vmatmul.mubr.f32.gmra.mrb[0].mxu0 %v813
    %v881 = vpop.f32.mrb[0].mxu0
    %v882 = vadd.f32 0.0, %v881
    %v883 = vpop.f32.mrb[0].mxu0
    %884 = vdwg.mxu0
    %v886 = vsel %vm536, %v563, 0
    %888 = vmatprep.subr.mxu0 0.0
    %889 = vmatpush1.msra.mxu0 %v380
    %890 = vmatprep.subr.mxu0 0.0
    %891 = vmatpush1.msra.mxu0 0.0
    %892 = vmatprep.subr.mxu0 0.0
    %893 = vmatpush1.msra.mxu0 0.0
    %894 = vmatprep.subr.mxu0 0.0
    %895 = vmatpush1.msra.mxu0 0.0
    %896 = vmatprep.subr.mxu0 0.0
    %897 = vmatpush1.msra.mxu0 0.0
    %898 = vmatprep.subr.mxu0 0.0
    %899 = vmatpush1.msra.mxu0 0.0
    %900 = vmatprep.subr.mxu0 0.0
    %901 = vmatpush1.msra.mxu0 0.0
    %902 = vmatprep.subr.mxu0 0.0
    %903 = vmatpush1.msra.mxu0 0.0
    %904 = vmatprep.subr.mxu0 0.0
    %905 = vmatpush1.msra.mxu0 0.0
    %906 = vmatprep.subr.mxu0 0.0
    %907 = vmatpush1.msra.mxu0 0.0
    %908 = vmatprep.subr.mxu0 0.0
    %909 = vmatpush1.msra.mxu0 0.0
    %910 = vmatprep.subr.mxu0 0.0
    %911 = vmatpush1.msra.mxu0 0.0
    %912 = vmatprep.subr.mxu0 0.0
    %913 = vmatpush1.msra.mxu0 0.0
    %914 = vmatprep.subr.mxu0 0.0
    %915 = vmatpush1.msra.mxu0 0.0
    %916 = vmatprep.subr.mxu0 0.0
    %917 = vmatpush1.msra.mxu0 0.0
    %918 = vmatprep.subr.mxu0 0.0
    %919 = vmatpush1.msra.mxu0 0.0
    %920 = vmatprep.subr.mxu0 0.0
    %921 = vmatpush1.msra.mxu0 0.0
    %922 = vmatprep.subr.mxu0 0.0
    %923 = vmatpush1.msra.mxu0 0.0
    %924 = vmatprep.subr.mxu0 0.0
    %925 = vmatpush1.msra.mxu0 0.0
    %926 = vmatprep.subr.mxu0 0.0
    %927 = vmatpush1.msra.mxu0 0.0
    %928 = vmatprep.subr.mxu0 0.0
    %929 = vmatpush1.msra.mxu0 0.0
    %930 = vmatprep.subr.mxu0 0.0
    %931 = vmatpush1.msra.mxu0 0.0
    %932 = vmatprep.subr.mxu0 0.0
    %933 = vmatpush1.msra.mxu0 0.0
    %934 = vmatprep.subr.mxu0 0.0
    %935 = vmatpush1.msra.mxu0 0.0
    %936 = vmatprep.subr.mxu0 0.0
    %937 = vmatpush1.msra.mxu0 0.0
    %938 = vmatprep.subr.mxu0 0.0
    %939 = vmatpush1.msra.mxu0 0.0
    %940 = vmatprep.subr.mxu0 0.0
    %941 = vmatpush1.msra.mxu0 0.0
    %942 = vmatprep.subr.mxu0 0.0
    %943 = vmatpush1.msra.mxu0 0.0
    %944 = vmatprep.subr.mxu0 0.0
    %945 = vmatpush1.msra.mxu0 0.0
    %946 = vmatprep.subr.mxu0 0.0
    %947 = vmatpush1.msra.mxu0 0.0
    %948 = vmatprep.subr.mxu0 0.0
    %949 = vmatpush1.msra.mxu0 0.0
    %950 = vmatprep.subr.mxu0 0.0
    %951 = vmatpush1.msra.mxu0 0.0
    %952 = vmatprep.mubr.f32.mxu0 0.0
    %953 = vmatmul.mubr.f32.gmra.mrb[0].mxu0 %v886
    %v954 = vpop.f32.mrb[0].mxu0
    %v955 = vadd.f32 %v809, %v954
    %v956 = vpop.f32.mrb[0].mxu0
    %957 = vdwg.mxu0
    %v959 = vsel %vm536, %v564, 0
    %961 = vmatprep.subr.mxu0 0.0
    %962 = vmatpush1.msra.mxu0 %v381
    %963 = vmatprep.subr.mxu0 0.0
    %964 = vmatpush1.msra.mxu0 0.0
    %965 = vmatprep.subr.mxu0 0.0
    %966 = vmatpush1.msra.mxu0 0.0
    %967 = vmatprep.subr.mxu0 0.0
    %968 = vmatpush1.msra.mxu0 0.0
    %969 = vmatprep.subr.mxu0 0.0
    %970 = vmatpush1.msra.mxu0 0.0
    %971 = vmatprep.subr.mxu0 0.0
    %972 = vmatpush1.msra.mxu0 0.0
    %973 = vmatprep.subr.mxu0 0.0
    %974 = vmatpush1.msra.mxu0 0.0
    %975 = vmatprep.subr.mxu0 0.0
    %976 = vmatpush1.msra.mxu0 0.0
    %977 = vmatprep.subr.mxu0 0.0
    %978 = vmatpush1.msra.mxu0 0.0
    %979 = vmatprep.subr.mxu0 0.0
    %980 = vmatpush1.msra.mxu0 0.0
    %981 = vmatprep.subr.mxu0 0.0
    %982 = vmatpush1.msra.mxu0 0.0
    %983 = vmatprep.subr.mxu0 0.0
    %984 = vmatpush1.msra.mxu0 0.0
    %985 = vmatprep.subr.mxu0 0.0
    %986 = vmatpush1.msra.mxu0 0.0
    %987 = vmatprep.subr.mxu0 0.0
    %988 = vmatpush1.msra.mxu0 0.0
    %989 = vmatprep.subr.mxu0 0.0
    %990 = vmatpush1.msra.mxu0 0.0
    %991 = vmatprep.subr.mxu0 0.0
    %992 = vmatpush1.msra.mxu0 0.0
    %993 = vmatprep.subr.mxu0 0.0
    %994 = vmatpush1.msra.mxu0 0.0
    %995 = vmatprep.subr.mxu0 0.0
    %996 = vmatpush1.msra.mxu0 0.0
    %997 = vmatprep.subr.mxu0 0.0
    %998 = vmatpush1.msra.mxu0 0.0
    %999 = vmatprep.subr.mxu0 0.0
    %1000 = vmatpush1.msra.mxu0 0.0
    %1001 = vmatprep.subr.mxu0 0.0
    %1002 = vmatpush1.msra.mxu0 0.0
    %1003 = vmatprep.subr.mxu0 0.0
    %1004 = vmatpush1.msra.mxu0 0.0
    %1005 = vmatprep.subr.mxu0 0.0
    %1006 = vmatpush1.msra.mxu0 0.0
    %1007 = vmatprep.subr.mxu0 0.0
    %1008 = vmatpush1.msra.mxu0 0.0
    %1009 = vmatprep.subr.mxu0 0.0
    %1010 = vmatpush1.msra.mxu0 0.0
    %1011 = vmatprep.subr.mxu0 0.0
    %1012 = vmatpush1.msra.mxu0 0.0
    %1013 = vmatprep.subr.mxu0 0.0
    %1014 = vmatpush1.msra.mxu0 0.0
    %1015 = vmatprep.subr.mxu0 0.0
    %1016 = vmatpush1.msra.mxu0 0.0
    %1017 = vmatprep.subr.mxu0 0.0
    %1018 = vmatpush1.msra.mxu0 0.0
    %1019 = vmatprep.subr.mxu0 0.0
    %1020 = vmatpush1.msra.mxu0 0.0
    %1021 = vmatprep.subr.mxu0 0.0
    %1022 = vmatpush1.msra.mxu0 0.0
    %1023 = vmatprep.subr.mxu0 0.0
    %1024 = vmatpush1.msra.mxu0 0.0
    %1025 = vmatprep.mubr.f32.mxu0 0.0
    %1026 = vmatmul.mubr.f32.gmra.mrb[0].mxu0 %v959
    %v1027 = vpop.f32.mrb[0].mxu0
    %v1028 = vadd.f32 %v882, %v1027
    %v1029 = vpop.f32.mrb[0].mxu0
    %1030 = vdwg.mxu0
    %v1031 = vld [vmem:[%s6] sm:$0x1]
    %v1033 = vlaneseq
    %v1034 = vshrl.u32 %v1033, 7
    %v1035 = vsub.s32 0, %v1034
    %v1036 = vrot.slane %v1031, %v1035
    %v1039 = vsel %vm115, %v955, 0
    %v1042 = vsel %vm115, %v1028, 0
    %1044 = vmatprep.subr.mxu0 0.0
    %1045 = vmatpush1.msra.mxu0 %v367
    %1046 = vmatprep.subr.mxu0 0.0
    %1047 = vmatpush1.msra.mxu0 %v368
    %1048 = vmatprep.subr.mxu0 0.0
    %1049 = vmatpush1.msra.mxu0 %v369
    %1050 = vmatprep.subr.mxu0 0.0
    %1051 = vmatpush1.msra.mxu0 %v370
    %1052 = vmatprep.subr.mxu0 0.0
    %1053 = vmatpush1.msra.mxu0 0.0
    %1054 = vmatprep.subr.mxu0 0.0
    %1055 = vmatpush1.msra.mxu0 0.0
    %1056 = vmatprep.subr.mxu0 0.0
    %1057 = vmatpush1.msra.mxu0 0.0
    %1058 = vmatprep.subr.mxu0 0.0
    %1059 = vmatpush1.msra.mxu0 0.0
    %1060 = vmatprep.subr.mxu0 0.0
    %1061 = vmatpush1.msra.mxu0 0.0
    %1062 = vmatprep.subr.mxu0 0.0
    %1063 = vmatpush1.msra.mxu0 0.0
    %1064 = vmatprep.subr.mxu0 0.0
    %1065 = vmatpush1.msra.mxu0 0.0
    %1066 = vmatprep.subr.mxu0 0.0
    %1067 = vmatpush1.msra.mxu0 0.0
    %1068 = vmatprep.subr.mxu0 0.0
    %1069 = vmatpush1.msra.mxu0 0.0
    %1070 = vmatprep.subr.mxu0 0.0
    %1071 = vmatpush1.msra.mxu0 0.0
    %1072 = vmatprep.subr.mxu0 0.0
    %1073 = vmatpush1.msra.mxu0 0.0
    %1074 = vmatprep.subr.mxu0 0.0
    %1075 = vmatpush1.msra.mxu0 0.0
    %1076 = vmatprep.subr.mxu0 0.0
    %1077 = vmatpush1.msra.mxu0 0.0
    %1078 = vmatprep.subr.mxu0 0.0
    %1079 = vmatpush1.msra.mxu0 0.0
    %1080 = vmatprep.subr.mxu0 0.0
    %1081 = vmatpush1.msra.mxu0 0.0
    %1082 = vmatprep.subr.mxu0 0.0
    %1083 = vmatpush1.msra.mxu0 0.0
    %1084 = vmatprep.subr.mxu0 0.0
    %1085 = vmatpush1.msra.mxu0 0.0
    %1086 = vmatprep.subr.mxu0 0.0
    %1087 = vmatpush1.msra.mxu0 0.0
    %1088 = vmatprep.subr.mxu0 0.0
    %1089 = vmatpush1.msra.mxu0 0.0
    %1090 = vmatprep.subr.mxu0 0.0
    %1091 = vmatpush1.msra.mxu0 0.0
    %1092 = vmatprep.subr.mxu0 0.0
    %1093 = vmatpush1.msra.mxu0 0.0
    %1094 = vmatprep.subr.mxu0 0.0
    %1095 = vmatpush1.msra.mxu0 0.0
    %1096 = vmatprep.subr.mxu0 0.0
    %1097 = vmatpush1.msra.mxu0 0.0
    %1098 = vmatprep.subr.mxu0 0.0
    %1099 = vmatpush1.msra.mxu0 0.0
    %1100 = vmatprep.subr.mxu0 0.0
    %1101 = vmatpush1.msra.mxu0 0.0
    %1102 = vmatprep.subr.mxu0 0.0
    %1103 = vmatpush1.msra.mxu0 0.0
    %1104 = vmatprep.subr.mxu0 0.0
    %1105 = vmatpush1.msra.mxu0 0.0
    %1106 = vmatprep.subr.mxu0 0.0
    %1107 = vmatpush1.msra.mxu0 0.0
    %1108 = vmatprep.mubr.f32.mxu0 0.0
    %1109 = vmatmul.mubr.f32.gmra.mrb[0].mxu0 %v1039
    %v1110 = vpop.f32.mrb[0].mxu0
    %v1111 = vadd.f32 %v1036, %v1110
    %v1112 = vpop.f32.mrb[0].mxu0
    %1113 = vmatprep.mubr.f32.mxu0 0.0
    %1114 = vmatmul.mubr.f32.gmra.mrb[0].mxu0 %v1042
    %v1115 = vpop.f32.mrb[0].mxu0
    %v1116 = vadd.f32 %v1036, %v1115
    %v1117 = vpop.f32.mrb[0].mxu0
    %1118 = vdwg.mxu0
    %1119 = vst.msk [vmem:[#allocation13] sm:$0xff] %vm115, %v1111
    %1120 = vst.msk [vmem:[#allocation13 + $0x8] sm:$0xff] %vm115, %v1116
    // Predicated region
    $region54: #{tpu_custom_call.1} parent=1 // pred_check
      _
    $region55: #{tpu_custom_call.1} parent=1 // pred_check_branch
      %1122 = sbr.rel (0) target = $region57
    $region56: #{tpu_custom_call.1} parent=1 // pred_region
      %s1124 = ssub.s32 256, 256
      %1125 = vsyncadd [#allocation4], %s1124
      %s1126 = sshll.u32 [#allocation13], 4
      %s1127 = int_to_ptr.vmem [resolvable:$true] %s1126
      %1132 = dma.vmem_to_hbm [thread:$0]  %s1127, 256, %s7, [#allocation4], 128, 128, 8
    $region57: #{tpu_custom_call.1} parent=1 // pred_fallthru
      _
    // Predicated region
    $region58: #{tpu_custom_call.1} parent=1 // pred_check
      _
    $region59: #{tpu_custom_call.1} parent=1 // pred_check_branch
      %1134 = sbr.rel (0) target = $region61
    $region60: #{tpu_custom_call.1} parent=1 // pred_region
      %1135 = dma.done [#allocation4], 256
    $region61: #{tpu_custom_call.1} parent=1 // pred_fallthru
      _
    %1136 = vsyncpa [#allocation3], 1
    %1137 = vsyncpa [#allocation6], 1
    %1138 = vsyncpa [#allocation9], 1
    %1139 = vsyncpa [#allocation12], 1
    %1140 = vsyncpa [#allocation4], 1

</llo_original>
